<compile_context>
chip_gen: v7x
topology: tpu7x:2x2x1
jax: 0.10.0
libtpu: 0.0.40
codegen_flags: <defaults>
</compile_context>

<pallas_src>
import numpy as np
import jax
import jax.numpy as jnp
from jax import lax
from jax.experimental import pallas as pl
from jax.experimental.pallas import tpu as pltpu

LANE = 128  # TPU lane width; all kernel last dims are padded to a multiple of this.


# ----------------------------- Pallas kernels -----------------------------

def conv_pool_kernel(p_ref, w_ref, b_ref, o_ref):
    """Fused conv(k=2) + bias + ReLU + 2x2/stride-2 max-pool over a row tile.

    p_ref: (4, TM, K)   im2col patches, one slab per pooling-window corner;
                        rows = (batch, pooled pixel), cols = (cin, kh, kw), zero-padded.
    w_ref: (K, LANE)    flattened conv weight, zero-padded.
    b_ref: (1, LANE)    conv bias, zero-padded.
    o_ref: (TM, LANE)   pooled + ReLU output, channels on lanes (lane-dense).
    """
    m = jnp.dot(p_ref[0], w_ref[...], preferred_element_type=jnp.float32)
    for k in range(1, 4):  # max over the 4 pool-window corners: pure VPU work
        m = jnp.maximum(m, jnp.dot(p_ref[k], w_ref[...],
                                   preferred_element_type=jnp.float32))
    o_ref[...] = jnp.maximum(m + b_ref[...], 0.0)


def conv_pool_mlp_kernel(p_ref, w_ref, b_ref,
                         w1_ref, b1_ref, w2_ref, b2_ref, w3_ref, b3_ref,
                         o_ref):
    """Fused conv2 + ReLU + pool2 + fc1 + ReLU + fc2 + ReLU + fc3.

    p_ref: (4, NPIX*N, K)  corner-grouped im2col patches, rows ordered (pixel, batch).
    o_ref: (N, LANE)       logits, zero-padded on lanes.
    """
    n = o_ref.shape[0]
    npix = p_ref.shape[1] // n

    m = jnp.dot(p_ref[0], w_ref[...], preferred_element_type=jnp.float32)
    for k in range(1, 4):
        m = jnp.maximum(m, jnp.dot(p_ref[k], w_ref[...],
                                   preferred_element_type=jnp.float32))
    pooled = jnp.maximum(m + b_ref[...], 0.0)               # (npix*n, LANE)

    # Flatten (pixel, channel) per batch element onto the lane axis: rows are ordered
    # (pixel, batch), so each pixel is a contiguous n-row slab; laying the slabs
    # side-by-side along lanes gives feat[b, pix*LANE + c].  fc1's weight rows were
    # permuted in the wrapper to match this layout (replaces the NCHW transpose).
    feat = jnp.concatenate([pooled[p * n:(p + 1) * n, :] for p in range(npix)],
                           axis=-1)                         # (n, npix*LANE)

    h = jnp.maximum(jnp.dot(feat, w1_ref[...], preferred_element_type=jnp.float32)
                    + b1_ref[...], 0.0)
    # TODO(synk): nn.Dropout(0.5) is applied as inference-mode identity (no RNG mask).
    h = jnp.maximum(jnp.dot(h, w2_ref[...], preferred_element_type=jnp.float32)
                    + b2_ref[...], 0.0)
    o_ref[...] = jnp.dot(h, w3_ref[...], preferred_element_type=jnp.float32) + b3_ref[...]


# ------------------------------ glue helpers ------------------------------

def _round_up(x, m):
    return (x + m - 1) // m * m


def _pad2(a, rows, cols):
    out = jnp.zeros((rows, cols), jnp.float32)
    return out.at[:a.shape[0], :a.shape[1]].set(a)


def _zero_map(ndim):
    if ndim == 1:
        return lambda i: (0,)
    if ndim == 2:
        return lambda i: (0, 0)
    return lambda i: (0, 0, 0)


def _corner_patches(img_nchw, di, dj, hp, wp):
    """im2col patches (k=2 'VALID' conv) at output pixels (2*ip+di, 2*jp+dj).

    img_nchw: (N, C, H, W).  Returns (N, hp*wp, C*4); row order (ip, jp),
    column order (c, kh, kw), matching PyTorch's weight.reshape(cout, -1).
    """
    n, c, _, _ = img_nchw.shape
    taps = []
    for kh in range(2):
        for kw in range(2):
            sub = lax.slice(img_nchw,
                            (0, 0, di + kh, dj + kw),
                            (n, c, di + kh + 2 * hp - 1, dj + kw + 2 * wp - 1),
                            (1, 1, 2, 2))                   # (N, C, hp, wp)
            taps.append(sub)
    t = jnp.stack(taps, axis=2)                             # (N, C, 4, hp, wp)
    t = jnp.transpose(t, (0, 3, 4, 1, 2))                   # (N, hp, wp, C, 4)
    return t.reshape(n, hp * wp, c * 4)


# ---------------------------- pallas_call wrappers -------------------------

def conv_pool_stage(patches, w_pad, b_pad, *, row_tile):
    nc, rows, kp = patches.shape
    grid = rows // row_tile
    return pl.pallas_call(
        conv_pool_kernel,
        out_shape=jax.ShapeDtypeStruct((rows, LANE), jnp.float32),
        grid=(grid,),
        in_specs=[
            pl.BlockSpec((nc, row_tile, kp), lambda i: (0, i, 0)),
            pl.BlockSpec((kp, LANE), lambda i: (0, 0)),
            pl.BlockSpec((1, LANE), lambda i: (0, 0)),
        ],
        out_specs=pl.BlockSpec((row_tile, LANE), lambda i: (i, 0)),
        compiler_params=pltpu.CompilerParams(dimension_semantics=("parallel",)),
    )(patches, w_pad, b_pad)


def conv_pool_mlp_stage(patches, w_conv, b_conv, w1, b1, w2, b2, w3, b3, n_batch):
    args = (patches, w_conv, b_conv, w1, b1, w2, b2, w3, b3)
    out_dim = b3.shape[1]
    return pl.pallas_call(
        conv_pool_mlp_kernel,
        out_shape=jax.ShapeDtypeStruct((n_batch, out_dim), jnp.float32),
        grid=(1,),
        in_specs=[pl.BlockSpec(a.shape, _zero_map(a.ndim)) for a in args],
        out_specs=pl.BlockSpec((n_batch, out_dim), _zero_map(2)),
    )(*args)


# ------------------------------ full forward -------------------------------

def rubber_toys_forward(x, p):
    n, cin, h, w = x.shape
    ho1, wo1 = h - 1, w - 1
    hp1, wp1 = ho1 // 2, wo1 // 2
    hp2, wp2 = (hp1 - 1) // 2, (wp1 - 1) // 2
    c1o = p['conv1_w'].shape[0]          # 12
    c2o = p['conv2_w'].shape[0]          # 24
    n_out = p['fc3_w'].shape[1]          # 3

    # ---- stage 1: conv1 + ReLU + maxpool, batch folded into matmul rows ----
    rows1 = n * hp1 * wp1
    p1 = jnp.stack([_corner_patches(x, di, dj, hp1, wp1).reshape(rows1, -1)
                    for di in (0, 1) for dj in (0, 1)], axis=0)       # (4, rows1, cin*4)
    row_tile = _round_up((rows1 + 1) // 2, 8)     # 2 row tiles -> parallel axis >= 2 (v7x)
    rows_pad = 2 * row_tile
    p1 = jnp.pad(p1, ((0, 0), (0, rows_pad - rows1), (0, LANE - p1.shape[-1])))
    w1m = _pad2(p['conv1_w'].reshape(c1o, -1).T, LANE, LANE)
    b1m = _pad2(p['conv1_b'].reshape(1, -1), 1, LANE)
    y1 = conv_pool_stage(p1, w1m, b1m, row_tile=row_tile)             # (rows_pad, 128)

    # ---- tiny glue (~5 KB): stage-2 im2col from the pooled stage-1 output ----
    pooled1 = jnp.transpose(y1[:rows1, :c1o].reshape(n, hp1, wp1, c1o),
                            (0, 3, 1, 2))                             # NCHW (n,12,7,7)
    npix = hp2 * wp2
    p2 = jnp.stack(
        [jnp.transpose(_corner_patches(pooled1, d, e, hp2, wp2), (1, 0, 2))
             .reshape(npix * n, -1)                                    # rows = (pixel, batch)
         for d in (0, 1) for e in (0, 1)], axis=0)                    # (4, npix*n, 48)
    p2 = jnp.pad(p2, ((0, 0), (0, 0), (0, LANE - p2.shape[-1])))

    w2m = _pad2(p['conv2_w'].reshape(c2o, -1).T, LANE, LANE)
    b2m = _pad2(p['conv2_b'].reshape(1, -1), 1, LANE)

    # fc1 weight: permute rows from PyTorch NCHW-flatten order (c*npix + pix) to the
    # kernel's (pix*LANE + c) feature layout (replaces the feature-map transpose).
    d1 = p['fc1_w'].shape[1]
    d1p = _round_up(d1, LANE)
    w1f = jnp.zeros((npix, LANE, d1p), jnp.float32)
    w1f = w1f.at[:, :c2o, :d1].set(
        jnp.transpose(p['fc1_w'].reshape(c2o, npix, d1), (1, 0, 2)))
    w1f = w1f.reshape(npix * LANE, d1p)
    b1f = _pad2(p['fc1_b'].reshape(1, -1), 1, d1p)

    d2p = _round_up(p['fc2_w'].shape[1], LANE)
    w2f = _pad2(p['fc2_w'], d1p, d2p)
    b2f = _pad2(p['fc2_b'].reshape(1, -1), 1, d2p)

    d3p = _round_up(n_out, LANE)
    w3f = _pad2(p['fc3_w'], d2p, d3p)
    b3f = _pad2(p['fc3_b'].reshape(1, -1), 1, d3p)

    logits = conv_pool_mlp_stage(p2, w2m, b2m, w1f, b1f, w2f, b2f, w3f, b3f, n_batch=n)
    return logits[:, :n_out]


# ------------------------------ params & ref --------------------------------

def init_params(key, h, w):
    hp1, wp1 = (h - 1) // 2, (w - 1) // 2
    hp2, wp2 = (hp1 - 1) // 2, (wp1 - 1) // 2
    to_linear = 24 * hp2 * wp2                      # _to_linear for this input size
    ks = jax.random.split(key, 10)

    def init(k, shape, fan_in):
        return jax.random.normal(k, shape, jnp.float32) / np.sqrt(float(fan_in))

    return dict(
        conv1_w=init(ks[0], (12, 3, 2, 2), 3 * 4),
        conv1_b=init(ks[1], (12,), 3 * 4),
        conv2_w=init(ks[2], (24, 12, 2, 2), 12 * 4),
        conv2_b=init(ks[3], (24,), 12 * 4),
        fc1_w=init(ks[4], (to_linear, 200), to_linear),
        fc1_b=init(ks[5], (200,), to_linear),
        fc2_w=init(ks[6], (200, 100), 200),
        fc2_b=init(ks[7], (100,), 200),
        fc3_w=init(ks[8], (100, 3), 100),
        fc3_b=init(ks[9], (3,), 100),
    )


def reference_forward(x, p):
    dn = ('NCHW', 'OIHW', 'NCHW')

    def pool(t):
        return lax.reduce_window(t, -jnp.inf, lax.max, (1, 1, 2, 2), (1, 1, 2, 2), 'VALID')

    c1 = lax.conv_general_dilated(x, p['conv1_w'], (1, 1), 'VALID', dimension_numbers=dn)
    c1 = pool(jnp.maximum(c1 + p['conv1_b'][None, :, None, None], 0.0))
    c2 = lax.conv_general_dilated(c1, p['conv2_w'], (1, 1), 'VALID', dimension_numbers=dn)
    c2 = pool(jnp.maximum(c2 + p['conv2_b'][None, :, None, None], 0.0))
    f = c2.reshape(x.shape[0], -1)
    h = jnp.maximum(f @ p['fc1_w'] + p['fc1_b'], 0.0)
    h = jnp.maximum(h @ p['fc2_w'] + p['fc2_b'], 0.0)
    return h @ p['fc3_w'] + p['fc3_b']


# ---------------------------------- main -------------------------------------

if __name__ == "__main__":
    key = jax.random.PRNGKey(0)
    kx, kp = jax.random.split(key)

    N, CIN, H, W = 2, 3, 16, 16
    x = jax.random.normal(kx, (N, CIN, H, W), jnp.float32)
    params = init_params(kp, H, W)

    fwd = jax.jit(rubber_toys_forward)
    out = jax.block_until_ready(fwd(x, params))

    ref = jax.block_until_ready(reference_forward(x, params))
    np.testing.assert_allclose(np.asarray(out), np.asarray(ref), rtol=1e-4, atol=1e-4)
    assert out.shape == (N, 3)

    print("KERNEL_OK")
</pallas_src>

<mosaic_0001>
module attributes {stable_mosaic.version = 11 : i64} {
  func.func @conv_pool_kernel(%arg0: i32, %arg1: memref<4x56x128xf32, #tpu.memory_space<vmem>>, %arg2: memref<128x128xf32, #tpu.memory_space<vmem>>, %arg3: memref<1x128xf32, #tpu.memory_space<vmem>>, %arg4: memref<56x128xf32, #tpu.memory_space<vmem>>) attributes {dimension_semantics = [#tpu.dimension_semantics<parallel>], iteration_bounds = array<i64: 2>, scalar_prefetch = 0 : i64, scratch_operands = 0 : i64, tpu.core_type = #tpu.core_type<tc>, window_params = [{transform_indices = @transform_0, window_bounds = array<i64: 4, 56, 128>}, {pipeline_mode = #tpu.pipeline_mode<synchronous>, transform_indices = @transform_1, window_bounds = array<i64: 128, 128>}, {pipeline_mode = #tpu.pipeline_mode<synchronous>, transform_indices = @transform_2, window_bounds = array<i64: 1, 128>}, {transform_indices = @transform_3, window_bounds = array<i64: 56, 128>}]} {
    %c0 = arith.constant 0 : index
    %c0_0 = arith.constant 0 : index
    %c0_1 = arith.constant 0 : index
    %0 = vector.load %arg1[%c0, %c0_0, %c0_1] : memref<4x56x128xf32, #tpu.memory_space<vmem>>, vector<1x56x128xf32>
    %1 = vector.shape_cast %0 : vector<1x56x128xf32> to vector<56x128xf32>
    %c0_2 = arith.constant 0 : index
    %c0_3 = arith.constant 0 : index
    %2 = vector.load %arg2[%c0_2, %c0_3] : memref<128x128xf32, #tpu.memory_space<vmem>>, vector<128x128xf32>
    %cst = arith.constant dense<0.000000e+00> : vector<56x128xf32>
    %3 = tpu.matmul %1, %2, %cst {dimension_numbers = #tpu.dot_dimension_numbers<[1], [0], [0], [1], [0, 0, 1, 1], [], []>} : vector<56x128xf32>, vector<128x128xf32>, vector<56x128xf32> -> vector<56x128xf32>
    %c1 = arith.constant 1 : index
    %c0_4 = arith.constant 0 : index
    %c0_5 = arith.constant 0 : index
    %4 = vector.load %arg1[%c1, %c0_4, %c0_5] : memref<4x56x128xf32, #tpu.memory_space<vmem>>, vector<1x56x128xf32>
    %5 = vector.shape_cast %4 : vector<1x56x128xf32> to vector<56x128xf32>
    %c0_6 = arith.constant 0 : index
    %c0_7 = arith.constant 0 : index
    %6 = vector.load %arg2[%c0_6, %c0_7] : memref<128x128xf32, #tpu.memory_space<vmem>>, vector<128x128xf32>
    %cst_8 = arith.constant dense<0.000000e+00> : vector<56x128xf32>
    %7 = tpu.matmul %5, %6, %cst_8 {dimension_numbers = #tpu.dot_dimension_numbers<[1], [0], [0], [1], [0, 0, 1, 1], [], []>} : vector<56x128xf32>, vector<128x128xf32>, vector<56x128xf32> -> vector<56x128xf32>
    %8 = arith.maximumf %3, %7 : vector<56x128xf32>
    %c2 = arith.constant 2 : index
    %c0_9 = arith.constant 0 : index
    %c0_10 = arith.constant 0 : index
    %9 = vector.load %arg1[%c2, %c0_9, %c0_10] : memref<4x56x128xf32, #tpu.memory_space<vmem>>, vector<1x56x128xf32>
    %10 = vector.shape_cast %9 : vector<1x56x128xf32> to vector<56x128xf32>
    %c0_11 = arith.constant 0 : index
    %c0_12 = arith.constant 0 : index
    %11 = vector.load %arg2[%c0_11, %c0_12] : memref<128x128xf32, #tpu.memory_space<vmem>>, vector<128x128xf32>
    %cst_13 = arith.constant dense<0.000000e+00> : vector<56x128xf32>
    %12 = tpu.matmul %10, %11, %cst_13 {dimension_numbers = #tpu.dot_dimension_numbers<[1], [0], [0], [1], [0, 0, 1, 1], [], []>} : vector<56x128xf32>, vector<128x128xf32>, vector<56x128xf32> -> vector<56x128xf32>
    %13 = arith.maximumf %8, %12 : vector<56x128xf32>
    %c3 = arith.constant 3 : index
    %c0_14 = arith.constant 0 : index
    %c0_15 = arith.constant 0 : index
    %14 = vector.load %arg1[%c3, %c0_14, %c0_15] : memref<4x56x128xf32, #tpu.memory_space<vmem>>, vector<1x56x128xf32>
    %15 = vector.shape_cast %14 : vector<1x56x128xf32> to vector<56x128xf32>
    %c0_16 = arith.constant 0 : index
    %c0_17 = arith.constant 0 : index
    %16 = vector.load %arg2[%c0_16, %c0_17] : memref<128x128xf32, #tpu.memory_space<vmem>>, vector<128x128xf32>
    %cst_18 = arith.constant dense<0.000000e+00> : vector<56x128xf32>
    %17 = tpu.matmul %15, %16, %cst_18 {dimension_numbers = #tpu.dot_dimension_numbers<[1], [0], [0], [1], [0, 0, 1, 1], [], []>} : vector<56x128xf32>, vector<128x128xf32>, vector<56x128xf32> -> vector<56x128xf32>
    %18 = arith.maximumf %13, %17 : vector<56x128xf32>
    %c0_19 = arith.constant 0 : index
    %c0_20 = arith.constant 0 : index
    %19 = vector.load %arg3[%c0_19, %c0_20] : memref<1x128xf32, #tpu.memory_space<vmem>>, vector<1x128xf32>
    %20 = vector.broadcast %19 : vector<1x128xf32> to vector<56x128xf32>
    %21 = arith.addf %18, %20 : vector<56x128xf32>
    %cst_21 = arith.constant 0.000000e+00 : f32
    %22 = vector.broadcast %cst_21 : f32 to vector<56x128xf32>
    %23 = arith.maximumf %21, %22 : vector<56x128xf32>
    %c0_22 = arith.constant 0 : index
    %c0_23 = arith.constant 0 : index
    %24 = vector.load %arg4[%c0_22, %c0_23] : memref<56x128xf32, #tpu.memory_space<vmem>>, vector<56x128xf32>
    tpu.vector_store %arg4[%c0_22, %c0_23], %23 {strides = array<i32>} : memref<56x128xf32, #tpu.memory_space<vmem>>, vector<56x128xf32>,
    return
  }
  func.func @transform_0(%arg0: i32) -> (i32, i32, i32) {
    %c0_i32 = arith.constant 0 : i32
    %c0_i32_0 = arith.constant 0 : i32
    %c0_i32_1 = arith.constant 0 : i32
    return %c0_i32, %arg0, %c0_i32_0 : i32, i32, i32
  }
  func.func @transform_1(%arg0: i32) -> (i32, i32) {
    %c0_i32 = arith.constant 0 : i32
    %c0_i32_0 = arith.constant 0 : i32
    %c0_i32_1 = arith.constant 0 : i32
    return %c0_i32, %c0_i32_0 : i32, i32
  }
  func.func @transform_2(%arg0: i32) -> (i32, i32) {
    %c0_i32 = arith.constant 0 : i32
    %c0_i32_0 = arith.constant 0 : i32
    %c0_i32_1 = arith.constant 0 : i32
    return %c0_i32, %c0_i32_0 : i32, i32
  }
  func.func @transform_3(%arg0: i32) -> (i32, i32) {
    %c0_i32 = arith.constant 0 : i32
    %c0_i32_0 = arith.constant 0 : i32
    return %arg0, %c0_i32 : i32, i32
  }
}

module attributes {stable_mosaic.version = 11 : i64} {
  func.func @conv_pool_mlp_kernel(%arg0: i32, %arg1: memref<4x18x128xf32, #tpu.memory_space<vmem>>, %arg2: memref<128x128xf32, #tpu.memory_space<vmem>>, %arg3: memref<1x128xf32, #tpu.memory_space<vmem>>, %arg4: memref<1152x256xf32, #tpu.memory_space<vmem>>, %arg5: memref<1x256xf32, #tpu.memory_space<vmem>>, %arg6: memref<256x128xf32, #tpu.memory_space<vmem>>, %arg7: memref<1x128xf32, #tpu.memory_space<vmem>>, %arg8: memref<128x128xf32, #tpu.memory_space<vmem>>, %arg9: memref<1x128xf32, #tpu.memory_space<vmem>>, %arg10: memref<2x128xf32, #tpu.memory_space<vmem>>) attributes {dimension_semantics = [#tpu.dimension_semantics<arbitrary>], iteration_bounds = array<i64: 1>, scalar_prefetch = 0 : i64, scratch_operands = 0 : i64, tpu.core_type = #tpu.core_type<tc>, window_params = [{pipeline_mode = #tpu.pipeline_mode<synchronous>, transform_indices = @transform_0, window_bounds = array<i64: 4, 18, 128>}, {pipeline_mode = #tpu.pipeline_mode<synchronous>, transform_indices = @transform_1, window_bounds = array<i64: 128, 128>}, {pipeline_mode = #tpu.pipeline_mode<synchronous>, transform_indices = @transform_2, window_bounds = array<i64: 1, 128>}, {pipeline_mode = #tpu.pipeline_mode<synchronous>, transform_indices = @transform_3, window_bounds = array<i64: 1152, 256>}, {pipeline_mode = #tpu.pipeline_mode<synchronous>, transform_indices = @transform_4, window_bounds = array<i64: 1, 256>}, {pipeline_mode = #tpu.pipeline_mode<synchronous>, transform_indices = @transform_5, window_bounds = array<i64: 256, 128>}, {pipeline_mode = #tpu.pipeline_mode<synchronous>, transform_indices = @transform_6, window_bounds = array<i64: 1, 128>}, {pipeline_mode = #tpu.pipeline_mode<synchronous>, transform_indices = @transform_7, window_bounds = array<i64: 128, 128>}, {pipeline_mode = #tpu.pipeline_mode<synchronous>, transform_indices = @transform_8, window_bounds = array<i64: 1, 128>}, {pipeline_mode = #tpu.pipeline_mode<synchronous>, transform_indices = @transform_9, window_bounds = array<i64: 2, 128>}]} {
    %c0 = arith.constant 0 : index
    %c0_0 = arith.constant 0 : index
    %c0_1 = arith.constant 0 : index
    %0 = vector.load %arg1[%c0, %c0_0, %c0_1] : memref<4x18x128xf32, #tpu.memory_space<vmem>>, vector<1x18x128xf32>
    %1 = vector.shape_cast %0 : vector<1x18x128xf32> to vector<18x128xf32>
    %c0_2 = arith.constant 0 : index
    %c0_3 = arith.constant 0 : index
    %2 = vector.load %arg2[%c0_2, %c0_3] : memref<128x128xf32, #tpu.memory_space<vmem>>, vector<128x128xf32>
    %cst = arith.constant dense<0.000000e+00> : vector<18x128xf32>
    %3 = tpu.matmul %1, %2, %cst {dimension_numbers = #tpu.dot_dimension_numbers<[1], [0], [0], [1], [0, 0, 1, 1], [], []>} : vector<18x128xf32>, vector<128x128xf32>, vector<18x128xf32> -> vector<18x128xf32>
    %c1 = arith.constant 1 : index
    %c0_4 = arith.constant 0 : index
    %c0_5 = arith.constant 0 : index
    %4 = vector.load %arg1[%c1, %c0_4, %c0_5] : memref<4x18x128xf32, #tpu.memory_space<vmem>>, vector<1x18x128xf32>
    %5 = vector.shape_cast %4 : vector<1x18x128xf32> to vector<18x128xf32>
    %c0_6 = arith.constant 0 : index
    %c0_7 = arith.constant 0 : index
    %6 = vector.load %arg2[%c0_6, %c0_7] : memref<128x128xf32, #tpu.memory_space<vmem>>, vector<128x128xf32>
    %cst_8 = arith.constant dense<0.000000e+00> : vector<18x128xf32>
    %7 = tpu.matmul %5, %6, %cst_8 {dimension_numbers = #tpu.dot_dimension_numbers<[1], [0], [0], [1], [0, 0, 1, 1], [], []>} : vector<18x128xf32>, vector<128x128xf32>, vector<18x128xf32> -> vector<18x128xf32>
    %8 = arith.maximumf %3, %7 : vector<18x128xf32>
    %c2 = arith.constant 2 : index
    %c0_9 = arith.constant 0 : index
    %c0_10 = arith.constant 0 : index
    %9 = vector.load %arg1[%c2, %c0_9, %c0_10] : memref<4x18x128xf32, #tpu.memory_space<vmem>>, vector<1x18x128xf32>
    %10 = vector.shape_cast %9 : vector<1x18x128xf32> to vector<18x128xf32>
    %c0_11 = arith.constant 0 : index
    %c0_12 = arith.constant 0 : index
    %11 = vector.load %arg2[%c0_11, %c0_12] : memref<128x128xf32, #tpu.memory_space<vmem>>, vector<128x128xf32>
    %cst_13 = arith.constant dense<0.000000e+00> : vector<18x128xf32>
    %12 = tpu.matmul %10, %11, %cst_13 {dimension_numbers = #tpu.dot_dimension_numbers<[1], [0], [0], [1], [0, 0, 1, 1], [], []>} : vector<18x128xf32>, vector<128x128xf32>, vector<18x128xf32> -> vector<18x128xf32>
    %13 = arith.maximumf %8, %12 : vector<18x128xf32>
    %c3 = arith.constant 3 : index
    %c0_14 = arith.constant 0 : index
    %c0_15 = arith.constant 0 : index
    %14 = vector.load %arg1[%c3, %c0_14, %c0_15] : memref<4x18x128xf32, #tpu.memory_space<vmem>>, vector<1x18x128xf32>
    %15 = vector.shape_cast %14 : vector<1x18x128xf32> to vector<18x128xf32>
    %c0_16 = arith.constant 0 : index
    %c0_17 = arith.constant 0 : index
    %16 = vector.load %arg2[%c0_16, %c0_17] : memref<128x128xf32, #tpu.memory_space<vmem>>, vector<128x128xf32>
    %cst_18 = arith.constant dense<0.000000e+00> : vector<18x128xf32>
    %17 = tpu.matmul %15, %16, %cst_18 {dimension_numbers = #tpu.dot_dimension_numbers<[1], [0], [0], [1], [0, 0, 1, 1], [], []>} : vector<18x128xf32>, vector<128x128xf32>, vector<18x128xf32> -> vector<18x128xf32>
    %18 = arith.maximumf %13, %17 : vector<18x128xf32>
    %c0_19 = arith.constant 0 : index
    %c0_20 = arith.constant 0 : index
    %19 = vector.load %arg3[%c0_19, %c0_20] : memref<1x128xf32, #tpu.memory_space<vmem>>, vector<1x128xf32>
    %20 = vector.broadcast %19 : vector<1x128xf32> to vector<18x128xf32>
    %21 = arith.addf %18, %20 : vector<18x128xf32>
    %cst_21 = arith.constant 0.000000e+00 : f32
    %22 = vector.broadcast %cst_21 : f32 to vector<18x128xf32>
    %23 = arith.maximumf %21, %22 : vector<18x128xf32>
    %24 = vector.extract_strided_slice %23 {offsets = [0, 0], sizes = [2, 128], strides = [1, 1]} : vector<18x128xf32> to vector<2x128xf32>
    %25 = vector.extract_strided_slice %23 {offsets = [2, 0], sizes = [2, 128], strides = [1, 1]} : vector<18x128xf32> to vector<2x128xf32>
    %26 = vector.extract_strided_slice %23 {offsets = [4, 0], sizes = [2, 128], strides = [1, 1]} : vector<18x128xf32> to vector<2x128xf32>
    %27 = vector.extract_strided_slice %23 {offsets = [6, 0], sizes = [2, 128], strides = [1, 1]} : vector<18x128xf32> to vector<2x128xf32>
    %28 = vector.extract_strided_slice %23 {offsets = [8, 0], sizes = [2, 128], strides = [1, 1]} : vector<18x128xf32> to vector<2x128xf32>
    %29 = vector.extract_strided_slice %23 {offsets = [10, 0], sizes = [2, 128], strides = [1, 1]} : vector<18x128xf32> to vector<2x128xf32>
    %30 = vector.extract_strided_slice %23 {offsets = [12, 0], sizes = [2, 128], strides = [1, 1]} : vector<18x128xf32> to vector<2x128xf32>
    %31 = vector.extract_strided_slice %23 {offsets = [14, 0], sizes = [2, 128], strides = [1, 1]} : vector<18x128xf32> to vector<2x128xf32>
    %32 = vector.extract_strided_slice %23 {offsets = [16, 0], sizes = [2, 128], strides = [1, 1]} : vector<18x128xf32> to vector<2x128xf32>
    %33 = tpu.concatenate %24, %25, %26, %27, %28, %29, %30, %31, %32 in 1 : vector<2x128xf32>, vector<2x128xf32>, vector<2x128xf32>, vector<2x128xf32>, vector<2x128xf32>, vector<2x128xf32>, vector<2x128xf32>, vector<2x128xf32>, vector<2x128xf32> -> vector<2x1152xf32>
    %c0_22 = arith.constant 0 : index
    %c0_23 = arith.constant 0 : index
    %34 = vector.load %arg4[%c0_22, %c0_23] : memref<1152x256xf32, #tpu.memory_space<vmem>>, vector<1152x256xf32>
    %cst_24 = arith.constant dense<0.000000e+00> : vector<2x256xf32>
    %35 = tpu.matmul %33, %34, %cst_24 {dimension_numbers = #tpu.dot_dimension_numbers<[1], [0], [0], [1], [0, 0, 1, 1], [], []>} : vector<2x1152xf32>, vector<1152x256xf32>, vector<2x256xf32> -> vector<2x256xf32>
    %c0_25 = arith.constant 0 : index
    %c0_26 = arith.constant 0 : index
    %36 = vector.load %arg5[%c0_25, %c0_26] : memref<1x256xf32, #tpu.memory_space<vmem>>, vector<1x256xf32>
    %37 = vector.broadcast %36 : vector<1x256xf32> to vector<2x256xf32>
    %38 = arith.addf %35, %37 : vector<2x256xf32>
    %cst_27 = arith.constant 0.000000e+00 : f32
    %39 = vector.broadcast %cst_27 : f32 to vector<2x256xf32>
    %40 = arith.maximumf %38, %39 : vector<2x256xf32>
    %c0_28 = arith.constant 0 : index
    %c0_29 = arith.constant 0 : index
    %41 = vector.load %arg6[%c0_28, %c0_29] : memref<256x128xf32, #tpu.memory_space<vmem>>, vector<256x128xf32>
    %cst_30 = arith.constant dense<0.000000e+00> : vector<2x128xf32>
    %42 = tpu.matmul %40, %41, %cst_30 {dimension_numbers = #tpu.dot_dimension_numbers<[1], [0], [0], [1], [0, 0, 1, 1], [], []>} : vector<2x256xf32>, vector<256x128xf32>, vector<2x128xf32> -> vector<2x128xf32>
    %c0_31 = arith.constant 0 : index
    %c0_32 = arith.constant 0 : index
    %43 = vector.load %arg7[%c0_31, %c0_32] : memref<1x128xf32, #tpu.memory_space<vmem>>, vector<1x128xf32>
    %44 = vector.broadcast %43 : vector<1x128xf32> to vector<2x128xf32>
    %45 = arith.addf %42, %44 : vector<2x128xf32>
    %cst_33 = arith.constant 0.000000e+00 : f32
    %46 = vector.broadcast %cst_33 : f32 to vector<2x128xf32>
    %47 = arith.maximumf %45, %46 : vector<2x128xf32>
    %c0_34 = arith.constant 0 : index
    %c0_35 = arith.constant 0 : index
    %48 = vector.load %arg8[%c0_34, %c0_35] : memref<128x128xf32, #tpu.memory_space<vmem>>, vector<128x128xf32>
    %cst_36 = arith.constant dense<0.000000e+00> : vector<2x128xf32>
    %49 = tpu.matmul %47, %48, %cst_36 {dimension_numbers = #tpu.dot_dimension_numbers<[1], [0], [0], [1], [0, 0, 1, 1], [], []>} : vector<2x128xf32>, vector<128x128xf32>, vector<2x128xf32> -> vector<2x128xf32>
    %c0_37 = arith.constant 0 : index
    %c0_38 = arith.constant 0 : index
    %50 = vector.load %arg9[%c0_37, %c0_38] : memref<1x128xf32, #tpu.memory_space<vmem>>, vector<1x128xf32>
    %51 = vector.broadcast %50 : vector<1x128xf32> to vector<2x128xf32>
    %52 = arith.addf %49, %51 : vector<2x128xf32>
    %c0_39 = arith.constant 0 : index
    %c0_40 = arith.constant 0 : index
    %53 = vector.load %arg10[%c0_39, %c0_40] : memref<2x128xf32, #tpu.memory_space<vmem>>, vector<2x128xf32>
    tpu.vector_store %arg10[%c0_39, %c0_40], %52 {strides = array<i32>} : memref<2x128xf32, #tpu.memory_space<vmem>>, vector<2x128xf32>,
    return
  }
  func.func @transform_0(%arg0: i32) -> (i32, i32, i32) {
    %c0_i32 = arith.constant 0 : i32
    %c0_i32_0 = arith.constant 0 : i32
    %c0_i32_1 = arith.constant 0 : i32
    %c0_i32_2 = arith.constant 0 : i32
    return %c0_i32, %c0_i32_0, %c0_i32_1 : i32, i32, i32
  }
  func.func @transform_1(%arg0: i32) -> (i32, i32) {
    %c0_i32 = arith.constant 0 : i32
    %c0_i32_0 = arith.constant 0 : i32
    %c0_i32_1 = arith.constant 0 : i32
    return %c0_i32, %c0_i32_0 : i32, i32
  }
  func.func @transform_2(%arg0: i32) -> (i32, i32) {
    %c0_i32 = arith.constant 0 : i32
    %c0_i32_0 = arith.constant 0 : i32
    %c0_i32_1 = arith.constant 0 : i32
    return %c0_i32, %c0_i32_0 : i32, i32
  }
  func.func @transform_3(%arg0: i32) -> (i32, i32) {
    %c0_i32 = arith.constant 0 : i32
    %c0_i32_0 = arith.constant 0 : i32
    %c0_i32_1 = arith.constant 0 : i32
    return %c0_i32, %c0_i32_0 : i32, i32
  }
  func.func @transform_4(%arg0: i32) -> (i32, i32) {
    %c0_i32 = arith.constant 0 : i32
    %c0_i32_0 = arith.constant 0 : i32
    %c0_i32_1 = arith.constant 0 : i32
    return %c0_i32, %c0_i32_0 : i32, i32
  }
  func.func @transform_5(%arg0: i32) -> (i32, i32) {
    %c0_i32 = arith.constant 0 : i32
    %c0_i32_0 = arith.constant 0 : i32
    %c0_i32_1 = arith.constant 0 : i32
    return %c0_i32, %c0_i32_0 : i32, i32
  }
  func.func @transform_6(%arg0: i32) -> (i32, i32) {
    %c0_i32 = arith.constant 0 : i32
    %c0_i32_0 = arith.constant 0 : i32
    %c0_i32_1 = arith.constant 0 : i32
    return %c0_i32, %c0_i32_0 : i32, i32
  }
  func.func @transform_7(%arg0: i32) -> (i32, i32) {
    %c0_i32 = arith.constant 0 : i32
    %c0_i32_0 = arith.constant 0 : i32
    %c0_i32_1 = arith.constant 0 : i32
    return %c0_i32, %c0_i32_0 : i32, i32
  }
  func.func @transform_8(%arg0: i32) -> (i32, i32) {
    %c0_i32 = arith.constant 0 : i32
    %c0_i32_0 = arith.constant 0 : i32
    %c0_i32_1 = arith.constant 0 : i32
    return %c0_i32, %c0_i32_0 : i32, i32
  }
  func.func @transform_9(%arg0: i32) -> (i32, i32) {
    %c0_i32 = arith.constant 0 : i32
    %c0_i32_0 = arith.constant 0 : i32
    %c0_i32_1 = arith.constant 0 : i32
    return %c0_i32, %c0_i32_0 : i32, i32
  }
}

</mosaic_0001>

<llo_original>
// kernel: rubber_toys_forward.2
$region0: #{rubber_toys_forward.2}
  #allocation0 [shape = 'u32[]', space=smem, size = 0x4, offset = 0x4, fixed_abs, tag = 'smem constant byte address 0x4 - core index']
  #allocation1 [shape = 'u32[144,128]{1,0:T(1,128)}', space=vmem, size = 0x12000, scoped, tag = 'internal scratch']
  %s0 = inlined_call_operand.vmem [shape: f32[4,112,128], index: 0, kind: input, shape index: {}]
  %s1 = inlined_call_operand.vmem [shape: f32[128,128], index: 1, kind: input, shape index: {}]
  %s2 = inlined_call_operand.vmem [shape: f32[1,128], index: 2, kind: input, shape index: {}]
  %s3 = inlined_call_operand.vmem [shape: f32[112,128], index: 3, kind: output, shape index: {}]
  %s4 = sld [smem:[#allocation0]]
  $region83: #{rubber_toys_forward.2} parent=0
    _
  %s6 = ssub.s32 1, %s4
  %s7 = scalar_select 0, %s6, %s4
  $region1: #{rubber_toys_forward.2} parent=0
    #allocation2 [shape = 'u8[229376]{0}', space=vmem, size = 0x38000, scoped, tag = 'input window, operand 0']
    loop: start=0, step=1, limit=4
    $region2: #{rubber_toys_forward.2} parent=1 // loop_pre_header
      _
    $region3: #{rubber_toys_forward.2} parent=1 // loop_header
      %s9 = sphi 0, %s13
      %p10 = scmp.ge.s32.totalorder %s9, 4
      %s19 = sphi 0, %s21
      %s22 = sphi 0, %s19
      %s23 = sphi 0, %s22
      %s39 = sphi 0, %s23
      %s43 = sphi 0, %s43
      %s45 = sphi 0, %s43
      %s46 = sphi 0, %s45
      %s60 = sphi 0, %s46
      %s64 = sphi 0, %s64
      %s66 = sphi 0, %s64
      %s67 = sphi 0, %s66
      %s81 = sphi 0, %s67
      %s87 = sphi 0, %s89
      %s90 = sphi 0, %s87
      %s91 = sphi 0, %s90
      %s107 = sphi 0, %s91
    $region4: #{rubber_toys_forward.2} parent=1 // loop_header_branch
      %12 = sbr.rel (%p10) target = $region8
    $region5: #{rubber_toys_forward.2} parent=1 // loop_body
      %s14 = ssub.s32 %s9, 1
      %s15 = ssub.s32 %s9, 2
      %s16 = sadd.s32 %s9, 1
      %s17 = ssub.s32 %s9, %s16
      %p18 = scmp.eq.s32.totalorder %s17, 0
      %s20 = sadd.s32 %s19, 1
      %s21 = scalar_select %p18, %s19, %s20
      %p24 = pneg %p18
      %p25 = scmp.eq.s32.totalorder %s9, 1
      %p26 = por %p24, %p25
      %p27 = scmp.ne.s32.totalorder %s19, %s22
      %p28 = scmp.eq.s32.totalorder %s9, 0
      %p29 = por %p27, %p28
      %p30 = scmp.ne.s32.totalorder %s19, %s22
      %p31 = scmp.eq.s32.totalorder %s14, 1
      %p32 = por %p30, %p31
      %p33 = scmp.ne.s32.totalorder %s22, %s23
      %p34 = scmp.eq.s32.totalorder %s14, 0
      %p35 = por %p33, %p34
      %p36 = scmp.ne.s32.totalorder %s22, %s23
      %p37 = scmp.eq.s32.totalorder %s15, 1
      %p38 = por %p36, %p37
      %p40 = scmp.ne.s32.totalorder %s23, %s39
      %p41 = scmp.eq.s32.totalorder %s15, 0
      %p42 = por %p40, %p41
      %s44 = sadd.s32 %s43, 1
      %p47 = scmp.eq.s32.totalorder %s9, 1
      %p48 = scmp.ne.s32.totalorder %s43, %s45
      %p49 = scmp.eq.s32.totalorder %s9, 0
      %p50 = por %p48, %p49
      %p51 = scmp.ne.s32.totalorder %s43, %s45
      %p52 = scmp.eq.s32.totalorder %s14, 1
      %p53 = por %p51, %p52
      %p54 = scmp.ne.s32.totalorder %s45, %s46
      %p55 = scmp.eq.s32.totalorder %s14, 0
      %p56 = por %p54, %p55
      %p57 = scmp.ne.s32.totalorder %s45, %s46
      %p58 = scmp.eq.s32.totalorder %s15, 1
      %p59 = por %p57, %p58
      %p61 = scmp.ne.s32.totalorder %s46, %s60
      %p62 = scmp.eq.s32.totalorder %s15, 0
      %p63 = por %p61, %p62
      %s65 = sadd.s32 %s64, 1
      %p68 = scmp.eq.s32.totalorder %s9, 1
      %p69 = scmp.ne.s32.totalorder %s64, %s66
      %p70 = scmp.eq.s32.totalorder %s9, 0
      %p71 = por %p69, %p70
      %p72 = scmp.ne.s32.totalorder %s64, %s66
      %p73 = scmp.eq.s32.totalorder %s14, 1
      %p74 = por %p72, %p73
      %p75 = scmp.ne.s32.totalorder %s66, %s67
      %p76 = scmp.eq.s32.totalorder %s14, 0
      %p77 = por %p75, %p76
      %p78 = scmp.ne.s32.totalorder %s66, %s67
      %p79 = scmp.eq.s32.totalorder %s15, 1
      %p80 = por %p78, %p79
      %p82 = scmp.ne.s32.totalorder %s67, %s81
      %p83 = scmp.eq.s32.totalorder %s15, 0
      %p84 = por %p82, %p83
      %s85 = ssub.s32 %s9, %s16
      %p86 = scmp.eq.s32.totalorder %s85, 0
      %s88 = sadd.s32 %s87, 1
      %s89 = scalar_select %p86, %s87, %s88
      %p92 = pneg %p86
      %p93 = scmp.eq.s32.totalorder %s9, 1
      %p94 = por %p92, %p93
      %p95 = scmp.ne.s32.totalorder %s87, %s90
      %p96 = scmp.eq.s32.totalorder %s9, 0
      %p97 = por %p95, %p96
      %p98 = scmp.ne.s32.totalorder %s87, %s90
      %p99 = scmp.eq.s32.totalorder %s14, 1
      %p100 = por %p98, %p99
      %p101 = scmp.ne.s32.totalorder %s90, %s91
      %p102 = scmp.eq.s32.totalorder %s14, 0
      %p103 = por %p101, %p102
      %p104 = scmp.ne.s32.totalorder %s90, %s91
      %p105 = scmp.eq.s32.totalorder %s15, 1
      %p106 = por %p104, %p105
      %p108 = scmp.ne.s32.totalorder %s91, %s107
      %p109 = scmp.eq.s32.totalorder %s15, 0
      %p110 = por %p108, %p109
      %p111 = scmp.le.s32.totalorder 1, %s9
      %p112 = scmp.lt.s32.totalorder %s9, 3
      %p113 = pnand %p111, %p112
      %p114 = pneg %p113
      // Predicated region
      $region9: #{rubber_toys_forward.2} parent=5 // pred_check
        _
      $region10: #{rubber_toys_forward.2} parent=5 // pred_check_branch
        %116 = sbr.rel (%p113) target = $region12
      $region11: #{rubber_toys_forward.2} parent=5 // pred_region
        %s117 = ssub.s32 %s9, 1
        // Predicated region
        $region13: #{rubber_toys_forward.2} parent=11 // pred_check
          %p118 = pneg %p56
        $region14: #{rubber_toys_forward.2} parent=11 // pred_check_branch
          %120 = sbr.rel (%p118) target = $region16
        $region15: #{rubber_toys_forward.2} parent=11 // pred_region
          _
        $region16: #{rubber_toys_forward.2} parent=11 // pred_fallthru
          _
        // Predicated region
        $region17: #{rubber_toys_forward.2} parent=11 // pred_check
          %p121 = pneg %p77
        $region18: #{rubber_toys_forward.2} parent=11 // pred_check_branch
          %123 = sbr.rel (%p121) target = $region20
        $region19: #{rubber_toys_forward.2} parent=11 // pred_region
          _
        $region20: #{rubber_toys_forward.2} parent=11 // pred_fallthru
          _
      $region12: #{rubber_toys_forward.2} parent=5 // pred_fallthru
        _
      %p124 = scmp.lt.s32.totalorder %s9, 2
      // Predicated region
      $region21: #{rubber_toys_forward.2} parent=5 // pred_check
        %p125 = pneg %p124
      $region22: #{rubber_toys_forward.2} parent=5 // pred_check_branch
        %127 = sbr.rel (%p125) target = $region24
      $region23: #{rubber_toys_forward.2} parent=5 // pred_region
        // Predicated region
        $region25: #{rubber_toys_forward.2} parent=23 // pred_check
          %p128 = pneg %p29
        $region26: #{rubber_toys_forward.2} parent=23 // pred_check_branch
          %130 = sbr.rel (%p128) target = $region28
        $region27: #{rubber_toys_forward.2} parent=23 // pred_region
          %s131 = sand.u32 %s19, 1
          %s132 = sand.u32 %s19, 1
          %s133 = smul.addr %s132, 224
          %s134 = scalar_lea.vmem [#allocation2], %s133
          %s135 = smul.u32 7, %s9
          %s136 = smul.addr %s135, 8
          %s137 = scalar_lea.vmem %s0, %s136
          // Predicated region
          $region29: #{rubber_toys_forward.2} parent=27 // pred_check
            _
          $region30: #{rubber_toys_forward.2} parent=27 // pred_check_branch
            %139 = sbr.rel (0) target = $region32
          $region31: #{rubber_toys_forward.2} parent=27 // pred_region
            // Predicated region
            $region33: #{rubber_toys_forward.2} parent=31 // pred_check
              _
            $region34: #{rubber_toys_forward.2} parent=31 // pred_check_branch
              %141 = sbr.rel (0) target = $region36
            $region35: #{rubber_toys_forward.2} parent=31 // pred_region
              // Predicated region
              $region48: #{rubber_toys_forward.2} parent=35 // pred_check
                _
              $region49: #{rubber_toys_forward.2} parent=35 // pred_check_branch
                %210 = sbr.rel (0) target = $region51
              $region50: #{rubber_toys_forward.2} parent=35 // pred_region
                loop: start=0, step=1, limit=1
                $region52: #{rubber_toys_forward.2} parent=50 // loop_pre_header
                  _
                $region53: #{rubber_toys_forward.2} parent=50 // loop_header
                  %s212 = sphi 0, %s216
                  %p213 = scmp.ge.s32.totalorder %s212, 1
                  %s217 = sphi %s137, %s137
                  %s218 = sphi %s134, %s134
                $region54: #{rubber_toys_forward.2} parent=50 // loop_header_branch
                  %215 = sbr.rel (%p213) target = $region58
                $region55: #{rubber_toys_forward.2} parent=50 // loop_body
                  %v219 = vld [vmem:[%s217] sm:$0xff]
                  %220 = vst [vmem:[%s218] sm:$0xff] %v219
                  %v221 = vld [vmem:[%s217 + $0x8] sm:$0xff]
                  %222 = vst [vmem:[%s218 + $0x8] sm:$0xff] %v221
                  %v223 = vld [vmem:[%s217 + $0x10] sm:$0xff]
                  %224 = vst [vmem:[%s218 + $0x10] sm:$0xff] %v223
                  %v225 = vld [vmem:[%s217 + $0x18] sm:$0xff]
                  %226 = vst [vmem:[%s218 + $0x18] sm:$0xff] %v225
                  %v227 = vld [vmem:[%s217 + $0x20] sm:$0xff]
                  %228 = vst [vmem:[%s218 + $0x20] sm:$0xff] %v227
                  %v229 = vld [vmem:[%s217 + $0x28] sm:$0xff]
                  %230 = vst [vmem:[%s218 + $0x28] sm:$0xff] %v229
                  %v231 = vld [vmem:[%s217 + $0x30] sm:$0xff]
                  %232 = vst [vmem:[%s218 + $0x30] sm:$0xff] %v231
                  %v233 = vld [vmem:[%s217 + $0x70] sm:$0xff]
                  %234 = vst [vmem:[%s218 + $0x38] sm:$0xff] %v233
                  %v235 = vld [vmem:[%s217 + $0x78] sm:$0xff]
                  %236 = vst [vmem:[%s218 + $0x40] sm:$0xff] %v235
                  %v237 = vld [vmem:[%s217 + $0x80] sm:$0xff]
                  %238 = vst [vmem:[%s218 + $0x48] sm:$0xff] %v237
                  %v239 = vld [vmem:[%s217 + $0x88] sm:$0xff]
                  %240 = vst [vmem:[%s218 + $0x50] sm:$0xff] %v239
                  %v241 = vld [vmem:[%s217 + $0x90] sm:$0xff]
                  %242 = vst [vmem:[%s218 + $0x58] sm:$0xff] %v241
                  %v243 = vld [vmem:[%s217 + $0x98] sm:$0xff]
                  %244 = vst [vmem:[%s218 + $0x60] sm:$0xff] %v243
                  %v245 = vld [vmem:[%s217 + $0xa0] sm:$0xff]
                  %246 = vst [vmem:[%s218 + $0x68] sm:$0xff] %v245
                  %v247 = vld [vmem:[%s217 + $0xe0] sm:$0xff]
                  %248 = vst [vmem:[%s218 + $0x70] sm:$0xff] %v247
                  %v249 = vld [vmem:[%s217 + $0xe8] sm:$0xff]
                  %250 = vst [vmem:[%s218 + $0x78] sm:$0xff] %v249
                  %v251 = vld [vmem:[%s217 + $0xf0] sm:$0xff]
                  %252 = vst [vmem:[%s218 + $0x80] sm:$0xff] %v251
                  %v253 = vld [vmem:[%s217 + $0xf8] sm:$0xff]
                  %254 = vst [vmem:[%s218 + $0x88] sm:$0xff] %v253
                  %v255 = vld [vmem:[%s217 + $0x100] sm:$0xff]
                  %256 = vst [vmem:[%s218 + $0x90] sm:$0xff] %v255
                  %v257 = vld [vmem:[%s217 + $0x108] sm:$0xff]
                  %258 = vst [vmem:[%s218 + $0x98] sm:$0xff] %v257
                  %v259 = vld [vmem:[%s217 + $0x110] sm:$0xff]
                  %260 = vst [vmem:[%s218 + $0xa0] sm:$0xff] %v259
                  %v261 = vld [vmem:[%s217 + $0x150] sm:$0xff]
                  %262 = vst [vmem:[%s218 + $0xa8] sm:$0xff] %v261
                  %v263 = vld [vmem:[%s217 + $0x158] sm:$0xff]
                  %264 = vst [vmem:[%s218 + $0xb0] sm:$0xff] %v263
                  %v265 = vld [vmem:[%s217 + $0x160] sm:$0xff]
                  %266 = vst [vmem:[%s218 + $0xb8] sm:$0xff] %v265
                  %v267 = vld [vmem:[%s217 + $0x168] sm:$0xff]
                  %268 = vst [vmem:[%s218 + $0xc0] sm:$0xff] %v267
                  %v269 = vld [vmem:[%s217 + $0x170] sm:$0xff]
                  %270 = vst [vmem:[%s218 + $0xc8] sm:$0xff] %v269
                  %v271 = vld [vmem:[%s217 + $0x178] sm:$0xff]
                  %272 = vst [vmem:[%s218 + $0xd0] sm:$0xff] %v271
                  %v273 = vld [vmem:[%s217 + $0x180] sm:$0xff]
                  %274 = vst [vmem:[%s218 + $0xd8] sm:$0xff] %v273
                $region56: #{rubber_toys_forward.2} parent=50 // loop_footer
                  %s216 = sadd.s32 1, %s212
                $region57: #{rubber_toys_forward.2} parent=50 // loop_footer_branch
                  %211 = sbr.rel target = $region53
                $region58: #{rubber_toys_forward.2} parent=50 // loop_exit
                  _
              $region51: #{rubber_toys_forward.2} parent=35 // pred_fallthru
                _
              // Predicated region
              $region59: #{rubber_toys_forward.2} parent=35 // pred_check
                _
              $region60: #{rubber_toys_forward.2} parent=35 // pred_check_branch
                %276 = sbr.rel target = $region62
              $region61: #{rubber_toys_forward.2} parent=35 // pred_region
                _
              $region62: #{rubber_toys_forward.2} parent=35 // pred_fallthru
                _
            $region36: #{rubber_toys_forward.2} parent=31 // pred_fallthru
              _
            // Predicated region
            $region37: #{rubber_toys_forward.2} parent=31 // pred_check
              _
            $region38: #{rubber_toys_forward.2} parent=31 // pred_check_branch
              %143 = sbr.rel target = $region40
            $region39: #{rubber_toys_forward.2} parent=31 // pred_region
              loop: start=0, step=1, limit=1
              $region41: #{rubber_toys_forward.2} parent=39 // loop_pre_header
                _
              $region42: #{rubber_toys_forward.2} parent=39 // loop_header
                %s146 = sphi 0, %s150
                %p147 = scmp.ge.s32.totalorder %s146, 1
                %s151 = sphi %s137, %s137
                %s152 = sphi %s134, %s134
              $region43: #{rubber_toys_forward.2} parent=39 // loop_header_branch
                %149 = sbr.rel (%p147) target = $region47
              $region44: #{rubber_toys_forward.2} parent=39 // loop_body
                %v153 = vld [vmem:[%s151] sm:$0xff]
                %154 = vst [vmem:[%s152] sm:$0xff] %v153
                %v155 = vld [vmem:[%s151 + $0x8] sm:$0xff]
                %156 = vst [vmem:[%s152 + $0x8] sm:$0xff] %v155
                %v157 = vld [vmem:[%s151 + $0x10] sm:$0xff]
                %158 = vst [vmem:[%s152 + $0x10] sm:$0xff] %v157
                %v159 = vld [vmem:[%s151 + $0x18] sm:$0xff]
                %160 = vst [vmem:[%s152 + $0x18] sm:$0xff] %v159
                %v161 = vld [vmem:[%s151 + $0x20] sm:$0xff]
                %162 = vst [vmem:[%s152 + $0x20] sm:$0xff] %v161
                %v163 = vld [vmem:[%s151 + $0x28] sm:$0xff]
                %164 = vst [vmem:[%s152 + $0x28] sm:$0xff] %v163
                %v165 = vld [vmem:[%s151 + $0x30] sm:$0xff]
                %166 = vst [vmem:[%s152 + $0x30] sm:$0xff] %v165
                %v167 = vld [vmem:[%s151 + $0x70] sm:$0xff]
                %168 = vst [vmem:[%s152 + $0x38] sm:$0xff] %v167
                %v169 = vld [vmem:[%s151 + $0x78] sm:$0xff]
                %170 = vst [vmem:[%s152 + $0x40] sm:$0xff] %v169
                %v171 = vld [vmem:[%s151 + $0x80] sm:$0xff]
                %172 = vst [vmem:[%s152 + $0x48] sm:$0xff] %v171
                %v173 = vld [vmem:[%s151 + $0x88] sm:$0xff]
                %174 = vst [vmem:[%s152 + $0x50] sm:$0xff] %v173
                %v175 = vld [vmem:[%s151 + $0x90] sm:$0xff]
                %176 = vst [vmem:[%s152 + $0x58] sm:$0xff] %v175
                %v177 = vld [vmem:[%s151 + $0x98] sm:$0xff]
                %178 = vst [vmem:[%s152 + $0x60] sm:$0xff] %v177
                %v179 = vld [vmem:[%s151 + $0xa0] sm:$0xff]
                %180 = vst [vmem:[%s152 + $0x68] sm:$0xff] %v179
                %v181 = vld [vmem:[%s151 + $0xe0] sm:$0xff]
                %182 = vst [vmem:[%s152 + $0x70] sm:$0xff] %v181
                %v183 = vld [vmem:[%s151 + $0xe8] sm:$0xff]
                %184 = vst [vmem:[%s152 + $0x78] sm:$0xff] %v183
                %v185 = vld [vmem:[%s151 + $0xf0] sm:$0xff]
                %186 = vst [vmem:[%s152 + $0x80] sm:$0xff] %v185
                %v187 = vld [vmem:[%s151 + $0xf8] sm:$0xff]
                %188 = vst [vmem:[%s152 + $0x88] sm:$0xff] %v187
                %v189 = vld [vmem:[%s151 + $0x100] sm:$0xff]
                %190 = vst [vmem:[%s152 + $0x90] sm:$0xff] %v189
                %v191 = vld [vmem:[%s151 + $0x108] sm:$0xff]
                %192 = vst [vmem:[%s152 + $0x98] sm:$0xff] %v191
                %v193 = vld [vmem:[%s151 + $0x110] sm:$0xff]
                %194 = vst [vmem:[%s152 + $0xa0] sm:$0xff] %v193
                %v195 = vld [vmem:[%s151 + $0x150] sm:$0xff]
                %196 = vst [vmem:[%s152 + $0xa8] sm:$0xff] %v195
                %v197 = vld [vmem:[%s151 + $0x158] sm:$0xff]
                %198 = vst [vmem:[%s152 + $0xb0] sm:$0xff] %v197
                %v199 = vld [vmem:[%s151 + $0x160] sm:$0xff]
                %200 = vst [vmem:[%s152 + $0xb8] sm:$0xff] %v199
                %v201 = vld [vmem:[%s151 + $0x168] sm:$0xff]
                %202 = vst [vmem:[%s152 + $0xc0] sm:$0xff] %v201
                %v203 = vld [vmem:[%s151 + $0x170] sm:$0xff]
                %204 = vst [vmem:[%s152 + $0xc8] sm:$0xff] %v203
                %v205 = vld [vmem:[%s151 + $0x178] sm:$0xff]
                %206 = vst [vmem:[%s152 + $0xd0] sm:$0xff] %v205
                %v207 = vld [vmem:[%s151 + $0x180] sm:$0xff]
                %208 = vst [vmem:[%s152 + $0xd8] sm:$0xff] %v207
              $region45: #{rubber_toys_forward.2} parent=39 // loop_footer
                %s150 = sadd.s32 1, %s146
              $region46: #{rubber_toys_forward.2} parent=39 // loop_footer_branch
                %145 = sbr.rel target = $region42
              $region47: #{rubber_toys_forward.2} parent=39 // loop_exit
                _
            $region40: #{rubber_toys_forward.2} parent=31 // pred_fallthru
              _
          $region32: #{rubber_toys_forward.2} parent=27 // pred_fallthru
            _
          %277 = vnop
        $region28: #{rubber_toys_forward.2} parent=23 // pred_fallthru
          _
      $region24: #{rubber_toys_forward.2} parent=5 // pred_fallthru
        _
      %p278 = scmp.le.s32.totalorder 1, %s9
      %p279 = scmp.lt.s32.totalorder %s9, 3
      %p280 = pnand %p278, %p279
      %p281 = pneg %p280
      // Predicated region
      $region63: #{rubber_toys_forward.2} parent=5 // pred_check
        _
      $region64: #{rubber_toys_forward.2} parent=5 // pred_check_branch
        %283 = sbr.rel (%p280) target = $region66
      $region65: #{rubber_toys_forward.2} parent=5 // pred_region
        %s284 = ssub.s32 %s9, 1
        %s285 = sand.u32 %s22, 1
        %s286 = sand.u32 %s22, 1
        %s287 = smul.addr %s286, 224
        %s288 = scalar_lea.vmem [#allocation2], %s287
        // Predicated region
        $region67: #{rubber_toys_forward.2} parent=65 // pred_check
          %p289 = pneg %p35
        $region68: #{rubber_toys_forward.2} parent=65 // pred_check_branch
          %291 = sbr.rel (%p289) target = $region70
        $region69: #{rubber_toys_forward.2} parent=65 // pred_region
          _
        $region70: #{rubber_toys_forward.2} parent=65 // pred_fallthru
          _
        %s292 = sand.u32 %s22, 1
        %s293 = sand.u32 %s22, 1
        %s294 = smul.addr %s293, 224
        %s295 = scalar_lea.vmem [#allocation2], %s294
        %p296 = pneg %p35
        %p297 = pneg %p32
        %p298 = pneg %p56
        %p299 = pneg %p53
        %p300 = pneg %p77
        %p301 = pneg %p74
        %p302 = pneg %p103
        %p303 = pneg %p100
        %s304 = smul.u32 7, %s14
        %p305 = scmp.lt.s32.totalorder %s304, 13
        %s306 = scalar_select %p305, %s304, 13
        %s307 = smul.addr %s306, 8
        %s308 = scalar_lea.vmem %s3, %s307
        %s309 = smul.u32 7, %s14
        %s310 = smul.u32 7, %s14
        %p311 = scmp.lt.s32.totalorder %s310, 13
        %s312 = scalar_select %p311, %s310, 13
        %s313 = smul.addr %s312, 8
        %s314 = scalar_lea.vmem %s3, %s313
        %s315 = smul.u32 7, %s14
        %v316 = vld [vmem:[%s288] sm:$0xff]
        %v317 = vld [vmem:[%s288 + $0x8] sm:$0xff]
        %v318 = vld [vmem:[%s288 + $0x10] sm:$0xff]
        %v319 = vld [vmem:[%s288 + $0x18] sm:$0xff]
        %v320 = vld [vmem:[%s288 + $0x20] sm:$0xff]
        %v321 = vld [vmem:[%s288 + $0x28] sm:$0xff]
        %v322 = vld [vmem:[%s288 + $0x30] sm:$0xff]
        %v323 = vld [vmem:[%s1] sm:$0xff]
        %v324 = vld [vmem:[%s1 + $0x8] sm:$0xff]
        %v325 = vld [vmem:[%s1 + $0x10] sm:$0xff]
        %v326 = vld [vmem:[%s1 + $0x18] sm:$0xff]
        %v327 = vld [vmem:[%s1 + $0x20] sm:$0xff]
        %v328 = vld [vmem:[%s1 + $0x28] sm:$0xff]
        %v329 = vld [vmem:[%s1 + $0x30] sm:$0xff]
        %v330 = vld [vmem:[%s1 + $0x38] sm:$0xff]
        %v331 = vld [vmem:[%s1 + $0x40] sm:$0xff]
        %v332 = vld [vmem:[%s1 + $0x48] sm:$0xff]
        %v333 = vld [vmem:[%s1 + $0x50] sm:$0xff]
        %v334 = vld [vmem:[%s1 + $0x58] sm:$0xff]
        %v335 = vld [vmem:[%s1 + $0x60] sm:$0xff]
        %v336 = vld [vmem:[%s1 + $0x68] sm:$0xff]
        %v337 = vld [vmem:[%s1 + $0x70] sm:$0xff]
        %v338 = vld [vmem:[%s1 + $0x78] sm:$0xff]
        %339 = vmatprep.subr.mxu0 0.0
        %340 = vmatpush1.msra.mxu0 %v323
        %341 = vmatprep.subr.mxu0 0.0
        %342 = vmatpush1.msra.mxu0 %v324
        %343 = vmatprep.subr.mxu0 0.0
        %344 = vmatpush1.msra.mxu0 %v325
        %345 = vmatprep.subr.mxu0 0.0
        %346 = vmatpush1.msra.mxu0 %v326
        %347 = vmatprep.subr.mxu0 0.0
        %348 = vmatpush1.msra.mxu0 %v327
        %349 = vmatprep.subr.mxu0 0.0
        %350 = vmatpush1.msra.mxu0 %v328
        %351 = vmatprep.subr.mxu0 0.0
        %352 = vmatpush1.msra.mxu0 %v329
        %353 = vmatprep.subr.mxu0 0.0
        %354 = vmatpush1.msra.mxu0 %v330
        %355 = vmatprep.subr.mxu0 0.0
        %356 = vmatpush1.msra.mxu0 %v331
        %357 = vmatprep.subr.mxu0 0.0
        %358 = vmatpush1.msra.mxu0 %v332
        %359 = vmatprep.subr.mxu0 0.0
        %360 = vmatpush1.msra.mxu0 %v333
        %361 = vmatprep.subr.mxu0 0.0
        %362 = vmatpush1.msra.mxu0 %v334
        %363 = vmatprep.subr.mxu0 0.0
        %364 = vmatpush1.msra.mxu0 %v335
        %365 = vmatprep.subr.mxu0 0.0
        %366 = vmatpush1.msra.mxu0 %v336
        %367 = vmatprep.subr.mxu0 0.0
        %368 = vmatpush1.msra.mxu0 %v337
        %369 = vmatprep.subr.mxu0 0.0
        %370 = vmatpush1.msra.mxu0 %v338
        %371 = vmatprep.subr.mxu0 0.0
        %372 = vmatpush1.msra.mxu0 0.0
        %373 = vmatprep.subr.mxu0 0.0
        %374 = vmatpush1.msra.mxu0 0.0
        %375 = vmatprep.subr.mxu0 0.0
        %376 = vmatpush1.msra.mxu0 0.0
        %377 = vmatprep.subr.mxu0 0.0
        %378 = vmatpush1.msra.mxu0 0.0
        %379 = vmatprep.subr.mxu0 0.0
        %380 = vmatpush1.msra.mxu0 0.0
        %381 = vmatprep.subr.mxu0 0.0
        %382 = vmatpush1.msra.mxu0 0.0
        %383 = vmatprep.subr.mxu0 0.0
        %384 = vmatpush1.msra.mxu0 0.0
        %385 = vmatprep.subr.mxu0 0.0
        %386 = vmatpush1.msra.mxu0 0.0
        %387 = vmatprep.subr.mxu0 0.0
        %388 = vmatpush1.msra.mxu0 0.0
        %389 = vmatprep.subr.mxu0 0.0
        %390 = vmatpush1.msra.mxu0 0.0
        %391 = vmatprep.subr.mxu0 0.0
        %392 = vmatpush1.msra.mxu0 0.0
        %393 = vmatprep.subr.mxu0 0.0
        %394 = vmatpush1.msra.mxu0 0.0
        %395 = vmatprep.subr.mxu0 0.0
        %396 = vmatpush1.msra.mxu0 0.0
        %397 = vmatprep.subr.mxu0 0.0
        %398 = vmatpush1.msra.mxu0 0.0
        %399 = vmatprep.subr.mxu0 0.0
        %400 = vmatpush1.msra.mxu0 0.0
        %401 = vmatprep.subr.mxu0 0.0
        %402 = vmatpush1.msra.mxu0 0.0
        %403 = vmatprep.mubr.f32.mxu0 0.0
        %404 = vmatmul.mubr.f32.gmra.mrb[0].mxu0 %v316
        %v405 = vpop.f32.mrb[0].mxu0
        %v406 = vadd.f32 0.0, %v405
        %v407 = vpop.f32.mrb[0].mxu0
        %408 = vmatprep.mubr.f32.mxu0 0.0
        %409 = vmatmul.mubr.f32.gmra.mrb[0].mxu0 %v317
        %v410 = vpop.f32.mrb[0].mxu0
        %v411 = vadd.f32 0.0, %v410
        %v412 = vpop.f32.mrb[0].mxu0
        %413 = vmatprep.mubr.f32.mxu0 0.0
        %414 = vmatmul.mubr.f32.gmra.mrb[0].mxu0 %v318
        %v415 = vpop.f32.mrb[0].mxu0
        %v416 = vadd.f32 0.0, %v415
        %v417 = vpop.f32.mrb[0].mxu0
        %418 = vmatprep.mubr.f32.mxu0 0.0
        %419 = vmatmul.mubr.f32.gmra.mrb[0].mxu0 %v319
        %v420 = vpop.f32.mrb[0].mxu0
        %v421 = vadd.f32 0.0, %v420
        %v422 = vpop.f32.mrb[0].mxu0
        %423 = vmatprep.mubr.f32.mxu0 0.0
        %424 = vmatmul.mubr.f32.gmra.mrb[0].mxu0 %v320
        %v425 = vpop.f32.mrb[0].mxu0
        %v426 = vadd.f32 0.0, %v425
        %v427 = vpop.f32.mrb[0].mxu0
        %428 = vmatprep.mubr.f32.mxu0 0.0
        %429 = vmatmul.mubr.f32.gmra.mrb[0].mxu0 %v321
        %v430 = vpop.f32.mrb[0].mxu0
        %v431 = vadd.f32 0.0, %v430
        %v432 = vpop.f32.mrb[0].mxu0
        %433 = vmatprep.mubr.f32.mxu0 0.0
        %434 = vmatmul.mubr.f32.gmra.mrb[0].mxu0 %v322
        %v435 = vpop.f32.mrb[0].mxu0
        %v436 = vadd.f32 0.0, %v435
        %v437 = vpop.f32.mrb[0].mxu0
        %438 = vdwg.mxu0
        %s439 = scalar_lea.vmem %s288, 56 [#allocation2]
        %v440 = vld [vmem:[%s439] sm:$0xff]
        %v441 = vld [vmem:[%s439 + $0x8] sm:$0xff]
        %v442 = vld [vmem:[%s439 + $0x10] sm:$0xff]
        %v443 = vld [vmem:[%s439 + $0x18] sm:$0xff]
        %v444 = vld [vmem:[%s439 + $0x20] sm:$0xff]
        %v445 = vld [vmem:[%s439 + $0x28] sm:$0xff]
        %v446 = vld [vmem:[%s439 + $0x30] sm:$0xff]
        %447 = vmatprep.subr.mxu0 0.0
        %448 = vmatpush1.msra.mxu0 %v323
        %449 = vmatprep.subr.mxu0 0.0
        %450 = vmatpush1.msra.mxu0 %v324
        %451 = vmatprep.subr.mxu0 0.0
        %452 = vmatpush1.msra.mxu0 %v325
        %453 = vmatprep.subr.mxu0 0.0
        %454 = vmatpush1.msra.mxu0 %v326
        %455 = vmatprep.subr.mxu0 0.0
        %456 = vmatpush1.msra.mxu0 %v327
        %457 = vmatprep.subr.mxu0 0.0
        %458 = vmatpush1.msra.mxu0 %v328
        %459 = vmatprep.subr.mxu0 0.0
        %460 = vmatpush1.msra.mxu0 %v329
        %461 = vmatprep.subr.mxu0 0.0
        %462 = vmatpush1.msra.mxu0 %v330
        %463 = vmatprep.subr.mxu0 0.0
        %464 = vmatpush1.msra.mxu0 %v331
        %465 = vmatprep.subr.mxu0 0.0
        %466 = vmatpush1.msra.mxu0 %v332
        %467 = vmatprep.subr.mxu0 0.0
        %468 = vmatpush1.msra.mxu0 %v333
        %469 = vmatprep.subr.mxu0 0.0
        %470 = vmatpush1.msra.mxu0 %v334
        %471 = vmatprep.subr.mxu0 0.0
        %472 = vmatpush1.msra.mxu0 %v335
        %473 = vmatprep.subr.mxu0 0.0
        %474 = vmatpush1.msra.mxu0 %v336
        %475 = vmatprep.subr.mxu0 0.0
        %476 = vmatpush1.msra.mxu0 %v337
        %477 = vmatprep.subr.mxu0 0.0
        %478 = vmatpush1.msra.mxu0 %v338
        %479 = vmatprep.subr.mxu0 0.0
        %480 = vmatpush1.msra.mxu0 0.0
        %481 = vmatprep.subr.mxu0 0.0
        %482 = vmatpush1.msra.mxu0 0.0
        %483 = vmatprep.subr.mxu0 0.0
        %484 = vmatpush1.msra.mxu0 0.0
        %485 = vmatprep.subr.mxu0 0.0
        %486 = vmatpush1.msra.mxu0 0.0
        %487 = vmatprep.subr.mxu0 0.0
        %488 = vmatpush1.msra.mxu0 0.0
        %489 = vmatprep.subr.mxu0 0.0
        %490 = vmatpush1.msra.mxu0 0.0
        %491 = vmatprep.subr.mxu0 0.0
        %492 = vmatpush1.msra.mxu0 0.0
        %493 = vmatprep.subr.mxu0 0.0
        %494 = vmatpush1.msra.mxu0 0.0
        %495 = vmatprep.subr.mxu0 0.0
        %496 = vmatpush1.msra.mxu0 0.0
        %497 = vmatprep.subr.mxu0 0.0
        %498 = vmatpush1.msra.mxu0 0.0
        %499 = vmatprep.subr.mxu0 0.0
        %500 = vmatpush1.msra.mxu0 0.0
        %501 = vmatprep.subr.mxu0 0.0
        %502 = vmatpush1.msra.mxu0 0.0
        %503 = vmatprep.subr.mxu0 0.0
        %504 = vmatpush1.msra.mxu0 0.0
        %505 = vmatprep.subr.mxu0 0.0
        %506 = vmatpush1.msra.mxu0 0.0
        %507 = vmatprep.subr.mxu0 0.0
        %508 = vmatpush1.msra.mxu0 0.0
        %509 = vmatprep.subr.mxu0 0.0
        %510 = vmatpush1.msra.mxu0 0.0
        %511 = vmatprep.mubr.f32.mxu0 0.0
        %512 = vmatmul.mubr.f32.gmra.mrb[0].mxu0 %v440
        %v513 = vpop.f32.mrb[0].mxu0
        %v514 = vadd.f32 0.0, %v513
        %v515 = vpop.f32.mrb[0].mxu0
        %516 = vmatprep.mubr.f32.mxu0 0.0
        %517 = vmatmul.mubr.f32.gmra.mrb[0].mxu0 %v441
        %v518 = vpop.f32.mrb[0].mxu0
        %v519 = vadd.f32 0.0, %v518
        %v520 = vpop.f32.mrb[0].mxu0
        %521 = vmatprep.mubr.f32.mxu0 0.0
        %522 = vmatmul.mubr.f32.gmra.mrb[0].mxu0 %v442
        %v523 = vpop.f32.mrb[0].mxu0
        %v524 = vadd.f32 0.0, %v523
        %v525 = vpop.f32.mrb[0].mxu0
        %526 = vmatprep.mubr.f32.mxu0 0.0
        %527 = vmatmul.mubr.f32.gmra.mrb[0].mxu0 %v443
        %v528 = vpop.f32.mrb[0].mxu0
        %v529 = vadd.f32 0.0, %v528
        %v530 = vpop.f32.mrb[0].mxu0
        %531 = vmatprep.mubr.f32.mxu0 0.0
        %532 = vmatmul.mubr.f32.gmra.mrb[0].mxu0 %v444
        %v533 = vpop.f32.mrb[0].mxu0
        %v534 = vadd.f32 0.0, %v533
        %v535 = vpop.f32.mrb[0].mxu0
        %536 = vmatprep.mubr.f32.mxu0 0.0
        %537 = vmatmul.mubr.f32.gmra.mrb[0].mxu0 %v445
        %v538 = vpop.f32.mrb[0].mxu0
        %v539 = vadd.f32 0.0, %v538
        %v540 = vpop.f32.mrb[0].mxu0
        %541 = vmatprep.mubr.f32.mxu0 0.0
        %542 = vmatmul.mubr.f32.gmra.mrb[0].mxu0 %v446
        %v543 = vpop.f32.mrb[0].mxu0
        %v544 = vadd.f32 0.0, %v543
        %v545 = vpop.f32.mrb[0].mxu0
        %546 = vdwg.mxu0
        %v547 = vmax.f32 %v406, %v514
        %v548 = vmax.f32 %v411, %v519
        %v549 = vmax.f32 %v416, %v524
        %v550 = vmax.f32 %v421, %v529
        %v551 = vmax.f32 %v426, %v534
        %v552 = vmax.f32 %v431, %v539
        %v553 = vmax.f32 %v436, %v544
        %s554 = scalar_lea.vmem %s288, 112 [#allocation2]
        %v555 = vld [vmem:[%s554] sm:$0xff]
        %v556 = vld [vmem:[%s554 + $0x8] sm:$0xff]
        %v557 = vld [vmem:[%s554 + $0x10] sm:$0xff]
        %v558 = vld [vmem:[%s554 + $0x18] sm:$0xff]
        %v559 = vld [vmem:[%s554 + $0x20] sm:$0xff]
        %v560 = vld [vmem:[%s554 + $0x28] sm:$0xff]
        %v561 = vld [vmem:[%s554 + $0x30] sm:$0xff]
        %562 = vmatprep.subr.mxu0 0.0
        %563 = vmatpush1.msra.mxu0 %v323
        %564 = vmatprep.subr.mxu0 0.0
        %565 = vmatpush1.msra.mxu0 %v324
        %566 = vmatprep.subr.mxu0 0.0
        %567 = vmatpush1.msra.mxu0 %v325
        %568 = vmatprep.subr.mxu0 0.0
        %569 = vmatpush1.msra.mxu0 %v326
        %570 = vmatprep.subr.mxu0 0.0
        %571 = vmatpush1.msra.mxu0 %v327
        %572 = vmatprep.subr.mxu0 0.0
        %573 = vmatpush1.msra.mxu0 %v328
        %574 = vmatprep.subr.mxu0 0.0
        %575 = vmatpush1.msra.mxu0 %v329
        %576 = vmatprep.subr.mxu0 0.0
        %577 = vmatpush1.msra.mxu0 %v330
        %578 = vmatprep.subr.mxu0 0.0
        %579 = vmatpush1.msra.mxu0 %v331
        %580 = vmatprep.subr.mxu0 0.0
        %581 = vmatpush1.msra.mxu0 %v332
        %582 = vmatprep.subr.mxu0 0.0
        %583 = vmatpush1.msra.mxu0 %v333
        %584 = vmatprep.subr.mxu0 0.0
        %585 = vmatpush1.msra.mxu0 %v334
        %586 = vmatprep.subr.mxu0 0.0
        %587 = vmatpush1.msra.mxu0 %v335
        %588 = vmatprep.subr.mxu0 0.0
        %589 = vmatpush1.msra.mxu0 %v336
        %590 = vmatprep.subr.mxu0 0.0
        %591 = vmatpush1.msra.mxu0 %v337
        %592 = vmatprep.subr.mxu0 0.0
        %593 = vmatpush1.msra.mxu0 %v338
        %594 = vmatprep.subr.mxu0 0.0
        %595 = vmatpush1.msra.mxu0 0.0
        %596 = vmatprep.subr.mxu0 0.0
        %597 = vmatpush1.msra.mxu0 0.0
        %598 = vmatprep.subr.mxu0 0.0
        %599 = vmatpush1.msra.mxu0 0.0
        %600 = vmatprep.subr.mxu0 0.0
        %601 = vmatpush1.msra.mxu0 0.0
        %602 = vmatprep.subr.mxu0 0.0
        %603 = vmatpush1.msra.mxu0 0.0
        %604 = vmatprep.subr.mxu0 0.0
        %605 = vmatpush1.msra.mxu0 0.0
        %606 = vmatprep.subr.mxu0 0.0
        %607 = vmatpush1.msra.mxu0 0.0
        %608 = vmatprep.subr.mxu0 0.0
        %609 = vmatpush1.msra.mxu0 0.0
        %610 = vmatprep.subr.mxu0 0.0
        %611 = vmatpush1.msra.mxu0 0.0
        %612 = vmatprep.subr.mxu0 0.0
        %613 = vmatpush1.msra.mxu0 0.0
        %614 = vmatprep.subr.mxu0 0.0
        %615 = vmatpush1.msra.mxu0 0.0
        %616 = vmatprep.subr.mxu0 0.0
        %617 = vmatpush1.msra.mxu0 0.0
        %618 = vmatprep.subr.mxu0 0.0
        %619 = vmatpush1.msra.mxu0 0.0
        %620 = vmatprep.subr.mxu0 0.0
        %621 = vmatpush1.msra.mxu0 0.0
        %622 = vmatprep.subr.mxu0 0.0
        %623 = vmatpush1.msra.mxu0 0.0
        %624 = vmatprep.subr.mxu0 0.0
        %625 = vmatpush1.msra.mxu0 0.0
        %626 = vmatprep.mubr.f32.mxu0 0.0
        %627 = vmatmul.mubr.f32.gmra.mrb[0].mxu0 %v555
        %v628 = vpop.f32.mrb[0].mxu0
        %v629 = vadd.f32 0.0, %v628
        %v630 = vpop.f32.mrb[0].mxu0
        %631 = vmatprep.mubr.f32.mxu0 0.0
        %632 = vmatmul.mubr.f32.gmra.mrb[0].mxu0 %v556
        %v633 = vpop.f32.mrb[0].mxu0
        %v634 = vadd.f32 0.0, %v633
        %v635 = vpop.f32.mrb[0].mxu0
        %636 = vmatprep.mubr.f32.mxu0 0.0
        %637 = vmatmul.mubr.f32.gmra.mrb[0].mxu0 %v557
        %v638 = vpop.f32.mrb[0].mxu0
        %v639 = vadd.f32 0.0, %v638
        %v640 = vpop.f32.mrb[0].mxu0
        %641 = vmatprep.mubr.f32.mxu0 0.0
        %642 = vmatmul.mubr.f32.gmra.mrb[0].mxu0 %v558
        %v643 = vpop.f32.mrb[0].mxu0
        %v644 = vadd.f32 0.0, %v643
        %v645 = vpop.f32.mrb[0].mxu0
        %646 = vmatprep.mubr.f32.mxu0 0.0
        %647 = vmatmul.mubr.f32.gmra.mrb[0].mxu0 %v559
        %v648 = vpop.f32.mrb[0].mxu0
        %v649 = vadd.f32 0.0, %v648
        %v650 = vpop.f32.mrb[0].mxu0
        %651 = vmatprep.mubr.f32.mxu0 0.0
        %652 = vmatmul.mubr.f32.gmra.mrb[0].mxu0 %v560
        %v653 = vpop.f32.mrb[0].mxu0
        %v654 = vadd.f32 0.0, %v653
        %v655 = vpop.f32.mrb[0].mxu0
        %656 = vmatprep.mubr.f32.mxu0 0.0
        %657 = vmatmul.mubr.f32.gmra.mrb[0].mxu0 %v561
        %v658 = vpop.f32.mrb[0].mxu0
        %v659 = vadd.f32 0.0, %v658
        %v660 = vpop.f32.mrb[0].mxu0
        %661 = vdwg.mxu0
        %v662 = vmax.f32 %v547, %v629
        %v663 = vmax.f32 %v548, %v634
        %v664 = vmax.f32 %v549, %v639
        %v665 = vmax.f32 %v550, %v644
        %v666 = vmax.f32 %v551, %v649
        %v667 = vmax.f32 %v552, %v654
        %v668 = vmax.f32 %v553, %v659
        %s669 = scalar_lea.vmem %s288, 168 [#allocation2]
        %v670 = vld [vmem:[%s669] sm:$0xff]
        %v671 = vld [vmem:[%s669 + $0x8] sm:$0xff]
        %v672 = vld [vmem:[%s669 + $0x10] sm:$0xff]
        %v673 = vld [vmem:[%s669 + $0x18] sm:$0xff]
        %v674 = vld [vmem:[%s669 + $0x20] sm:$0xff]
        %v675 = vld [vmem:[%s669 + $0x28] sm:$0xff]
        %v676 = vld [vmem:[%s669 + $0x30] sm:$0xff]
        %677 = vmatprep.subr.mxu0 0.0
        %678 = vmatpush1.msra.mxu0 %v323
        %679 = vmatprep.subr.mxu0 0.0
        %680 = vmatpush1.msra.mxu0 %v324
        %681 = vmatprep.subr.mxu0 0.0
        %682 = vmatpush1.msra.mxu0 %v325
        %683 = vmatprep.subr.mxu0 0.0
        %684 = vmatpush1.msra.mxu0 %v326
        %685 = vmatprep.subr.mxu0 0.0
        %686 = vmatpush1.msra.mxu0 %v327
        %687 = vmatprep.subr.mxu0 0.0
        %688 = vmatpush1.msra.mxu0 %v328
        %689 = vmatprep.subr.mxu0 0.0
        %690 = vmatpush1.msra.mxu0 %v329
        %691 = vmatprep.subr.mxu0 0.0
        %692 = vmatpush1.msra.mxu0 %v330
        %693 = vmatprep.subr.mxu0 0.0
        %694 = vmatpush1.msra.mxu0 %v331
        %695 = vmatprep.subr.mxu0 0.0
        %696 = vmatpush1.msra.mxu0 %v332
        %697 = vmatprep.subr.mxu0 0.0
        %698 = vmatpush1.msra.mxu0 %v333
        %699 = vmatprep.subr.mxu0 0.0
        %700 = vmatpush1.msra.mxu0 %v334
        %701 = vmatprep.subr.mxu0 0.0
        %702 = vmatpush1.msra.mxu0 %v335
        %703 = vmatprep.subr.mxu0 0.0
        %704 = vmatpush1.msra.mxu0 %v336
        %705 = vmatprep.subr.mxu0 0.0
        %706 = vmatpush1.msra.mxu0 %v337
        %707 = vmatprep.subr.mxu0 0.0
        %708 = vmatpush1.msra.mxu0 %v338
        %709 = vmatprep.subr.mxu0 0.0
        %710 = vmatpush1.msra.mxu0 0.0
        %711 = vmatprep.subr.mxu0 0.0
        %712 = vmatpush1.msra.mxu0 0.0
        %713 = vmatprep.subr.mxu0 0.0
        %714 = vmatpush1.msra.mxu0 0.0
        %715 = vmatprep.subr.mxu0 0.0
        %716 = vmatpush1.msra.mxu0 0.0
        %717 = vmatprep.subr.mxu0 0.0
        %718 = vmatpush1.msra.mxu0 0.0
        %719 = vmatprep.subr.mxu0 0.0
        %720 = vmatpush1.msra.mxu0 0.0
        %721 = vmatprep.subr.mxu0 0.0
        %722 = vmatpush1.msra.mxu0 0.0
        %723 = vmatprep.subr.mxu0 0.0
        %724 = vmatpush1.msra.mxu0 0.0
        %725 = vmatprep.subr.mxu0 0.0
        %726 = vmatpush1.msra.mxu0 0.0
        %727 = vmatprep.subr.mxu0 0.0
        %728 = vmatpush1.msra.mxu0 0.0
        %729 = vmatprep.subr.mxu0 0.0
        %730 = vmatpush1.msra.mxu0 0.0
        %731 = vmatprep.subr.mxu0 0.0
        %732 = vmatpush1.msra.mxu0 0.0
        %733 = vmatprep.subr.mxu0 0.0
        %734 = vmatpush1.msra.mxu0 0.0
        %735 = vmatprep.subr.mxu0 0.0
        %736 = vmatpush1.msra.mxu0 0.0
        %737 = vmatprep.subr.mxu0 0.0
        %738 = vmatpush1.msra.mxu0 0.0
        %739 = vmatprep.subr.mxu0 0.0
        %740 = vmatpush1.msra.mxu0 0.0
        %741 = vmatprep.mubr.f32.mxu0 0.0
        %742 = vmatmul.mubr.f32.gmra.mrb[0].mxu0 %v670
        %v743 = vpop.f32.mrb[0].mxu0
        %v744 = vadd.f32 0.0, %v743
        %v745 = vpop.f32.mrb[0].mxu0
        %746 = vmatprep.mubr.f32.mxu0 0.0
        %747 = vmatmul.mubr.f32.gmra.mrb[0].mxu0 %v671
        %v748 = vpop.f32.mrb[0].mxu0
        %v749 = vadd.f32 0.0, %v748
        %v750 = vpop.f32.mrb[0].mxu0
        %751 = vmatprep.mubr.f32.mxu0 0.0
        %752 = vmatmul.mubr.f32.gmra.mrb[0].mxu0 %v672
        %v753 = vpop.f32.mrb[0].mxu0
        %v754 = vadd.f32 0.0, %v753
        %v755 = vpop.f32.mrb[0].mxu0
        %756 = vmatprep.mubr.f32.mxu0 0.0
        %757 = vmatmul.mubr.f32.gmra.mrb[0].mxu0 %v673
        %v758 = vpop.f32.mrb[0].mxu0
        %v759 = vadd.f32 0.0, %v758
        %v760 = vpop.f32.mrb[0].mxu0
        %761 = vmatprep.mubr.f32.mxu0 0.0
        %762 = vmatmul.mubr.f32.gmra.mrb[0].mxu0 %v674
        %v763 = vpop.f32.mrb[0].mxu0
        %v764 = vadd.f32 0.0, %v763
        %v765 = vpop.f32.mrb[0].mxu0
        %766 = vmatprep.mubr.f32.mxu0 0.0
        %767 = vmatmul.mubr.f32.gmra.mrb[0].mxu0 %v675
        %v768 = vpop.f32.mrb[0].mxu0
        %v769 = vadd.f32 0.0, %v768
        %v770 = vpop.f32.mrb[0].mxu0
        %771 = vmatprep.mubr.f32.mxu0 0.0
        %772 = vmatmul.mubr.f32.gmra.mrb[0].mxu0 %v676
        %v773 = vpop.f32.mrb[0].mxu0
        %v774 = vadd.f32 0.0, %v773
        %v775 = vpop.f32.mrb[0].mxu0
        %776 = vdwg.mxu0
        %v777 = vmax.f32 %v662, %v744
        %v778 = vmax.f32 %v663, %v749
        %v779 = vmax.f32 %v664, %v754
        %v780 = vmax.f32 %v665, %v759
        %v781 = vmax.f32 %v666, %v764
        %v782 = vmax.f32 %v667, %v769
        %v783 = vmax.f32 %v668, %v774
        %v784 = vld [vmem:[%s2] sm:$0x1]
        %v786 = vlaneseq
        %v787 = vshrl.u32 %v786, 7
        %v788 = vsub.s32 0, %v787
        %v789 = vrot.slane %v784, %v788
        %v791 = vadd.f32 %v777, %v789
        %v792 = vadd.f32 %v778, %v789
        %v793 = vadd.f32 %v779, %v789
        %v794 = vadd.f32 %v780, %v789
        %v795 = vadd.f32 %v781, %v789
        %v796 = vadd.f32 %v782, %v789
        %v797 = vadd.f32 %v783, %v789
        %v798 = vmax.f32 %v791, 0.0
        %v799 = vmax.f32 %v792, 0.0
        %v800 = vmax.f32 %v793, 0.0
        %v801 = vmax.f32 %v794, 0.0
        %v802 = vmax.f32 %v795, 0.0
        %v803 = vmax.f32 %v796, 0.0
        %v804 = vmax.f32 %v797, 0.0
        %805 = vst [vmem:[%s314] sm:$0xff] %v798
        %806 = vst [vmem:[%s314 + $0x8] sm:$0xff] %v799
        %807 = vst [vmem:[%s314 + $0x10] sm:$0xff] %v800
        %808 = vst [vmem:[%s314 + $0x18] sm:$0xff] %v801
        %809 = vst [vmem:[%s314 + $0x20] sm:$0xff] %v802
        %810 = vst [vmem:[%s314 + $0x28] sm:$0xff] %v803
        %811 = vst [vmem:[%s314 + $0x30] sm:$0xff] %v804
        %s812 = smul.u32 7, %s14
        %p813 = scmp.lt.s32.totalorder %s812, 13
        %s814 = scalar_select %p813, %s812, 13
        %s815 = smul.addr %s814, 8
        %s816 = scalar_lea.vmem %s3, %s815
        // Predicated region
        $region71: #{rubber_toys_forward.2} parent=65 // pred_check
          %p817 = pneg %p100
        $region72: #{rubber_toys_forward.2} parent=65 // pred_check_branch
          %819 = sbr.rel (%p817) target = $region74
        $region73: #{rubber_toys_forward.2} parent=65 // pred_region
          %s820 = smul.u32 7, %s14
        $region74: #{rubber_toys_forward.2} parent=65 // pred_fallthru
          _
      $region66: #{rubber_toys_forward.2} parent=5 // pred_fallthru
        _
      %p821 = scmp.le.s32.totalorder 2, %s9
      // Predicated region
      $region75: #{rubber_toys_forward.2} parent=5 // pred_check
        %p822 = pneg %p821
      $region76: #{rubber_toys_forward.2} parent=5 // pred_check_branch
        %824 = sbr.rel (%p822) target = $region78
      $region77: #{rubber_toys_forward.2} parent=5 // pred_region
        %s825 = ssub.s32 %s9, 2
        // Predicated region
        $region79: #{rubber_toys_forward.2} parent=77 // pred_check
          %p826 = pneg %p106
        $region80: #{rubber_toys_forward.2} parent=77 // pred_check_branch
          %828 = sbr.rel (%p826) target = $region82
        $region81: #{rubber_toys_forward.2} parent=77 // pred_region
          %s829 = smul.u32 7, %s15
          %p830 = scmp.lt.s32.totalorder %s829, 13
          %s831 = scalar_select %p830, %s829, 13
          %s832 = smul.addr %s831, 8
          %s833 = scalar_lea.vmem %s3, %s832
        $region82: #{rubber_toys_forward.2} parent=77 // pred_fallthru
          _
      $region78: #{rubber_toys_forward.2} parent=5 // pred_fallthru
        _
    $region6: #{rubber_toys_forward.2} parent=1 // loop_footer
      %s13 = sadd.s32 1, %s9
    $region7: #{rubber_toys_forward.2} parent=1 // loop_footer_branch
      %8 = sbr.rel target = $region3
    $region8: #{rubber_toys_forward.2} parent=1 // loop_exit
      _

// kernel: rubber_toys_forward.3
$region0: #{rubber_toys_forward.3}
  #allocation0 [shape = 'u32[]', space=smem, size = 0x4, offset = 0x4, fixed_abs, tag = 'smem constant byte address 0x4 - core index']
  #allocation1 [shape = 'u32[144,128]{1,0:T(1,128)}', space=vmem, size = 0x12000, scoped, tag = 'internal scratch']
  %s0 = inlined_call_operand.vmem [shape: f32[4,18,128], index: 0, kind: input, shape index: {}]
  %s1 = inlined_call_operand.vmem [shape: f32[128,128], index: 1, kind: input, shape index: {}]
  %s2 = inlined_call_operand.vmem [shape: f32[1,128], index: 2, kind: input, shape index: {}]
  %s3 = inlined_call_operand.vmem [shape: f32[1152,256], index: 3, kind: input, shape index: {}]
  %s4 = inlined_call_operand.vmem [shape: f32[1,256], index: 4, kind: input, shape index: {}]
  %s5 = inlined_call_operand.vmem [shape: f32[256,128], index: 5, kind: input, shape index: {}]
  %s6 = inlined_call_operand.vmem [shape: f32[1,128], index: 6, kind: input, shape index: {}]
  %s7 = inlined_call_operand.vmem [shape: f32[128,128], index: 7, kind: input, shape index: {}]
  %s8 = inlined_call_operand.vmem [shape: f32[1,128], index: 8, kind: input, shape index: {}]
  %s9 = inlined_call_operand.hbm [shape: f32[2,128], index: 9, kind: output, shape index: {}]
  %s10 = sld [smem:[#allocation0]]
  $region46: #{rubber_toys_forward.3} parent=0
    _
  %s12 = ssub.s32 1, %s10
  %s13 = scalar_select 0, %s12, %s10
  $region1: #{rubber_toys_forward.3} parent=0
    #allocation2 [shape = 'u8[1024]{0}', space=vmem, size = 0x400, scoped, tag = 'output window, operand 0, single buffered']
    #allocation3 [shape = 's32[1]{0}', space=sflag, size = 0x4, scoped, tag = 'scoped memory for rubber_toys_forward.3']
    %14 = vsyncpa [#allocation3], 0
    // Predicated region
    $region2: #{rubber_toys_forward.3} parent=1 // pred_check
      _
    $region3: #{rubber_toys_forward.3} parent=1 // pred_check_branch
      %16 = sbr.rel (0) target = $region5
    $region4: #{rubber_toys_forward.3} parent=1 // pred_region
      _
    $region5: #{rubber_toys_forward.3} parent=1 // pred_fallthru
      _
    // Predicated region
    $region6: #{rubber_toys_forward.3} parent=1 // pred_check
      _
    $region7: #{rubber_toys_forward.3} parent=1 // pred_check_branch
      %18 = sbr.rel (0) target = $region9
    $region8: #{rubber_toys_forward.3} parent=1 // pred_region
      _
    $region9: #{rubber_toys_forward.3} parent=1 // pred_fallthru
      _
    // Predicated region
    $region10: #{rubber_toys_forward.3} parent=1 // pred_check
      _
    $region11: #{rubber_toys_forward.3} parent=1 // pred_check_branch
      %20 = sbr.rel (0) target = $region13
    $region12: #{rubber_toys_forward.3} parent=1 // pred_region
      _
    $region13: #{rubber_toys_forward.3} parent=1 // pred_fallthru
      _
    // Predicated region
    $region14: #{rubber_toys_forward.3} parent=1 // pred_check
      _
    $region15: #{rubber_toys_forward.3} parent=1 // pred_check_branch
      %22 = sbr.rel (0) target = $region17
    $region16: #{rubber_toys_forward.3} parent=1 // pred_region
      _
    $region17: #{rubber_toys_forward.3} parent=1 // pred_fallthru
      _
    // Predicated region
    $region18: #{rubber_toys_forward.3} parent=1 // pred_check
      _
    $region19: #{rubber_toys_forward.3} parent=1 // pred_check_branch
      %24 = sbr.rel (0) target = $region21
    $region20: #{rubber_toys_forward.3} parent=1 // pred_region
      _
    $region21: #{rubber_toys_forward.3} parent=1 // pred_fallthru
      _
    // Predicated region
    $region22: #{rubber_toys_forward.3} parent=1 // pred_check
      _
    $region23: #{rubber_toys_forward.3} parent=1 // pred_check_branch
      %26 = sbr.rel (0) target = $region25
    $region24: #{rubber_toys_forward.3} parent=1 // pred_region
      _
    $region25: #{rubber_toys_forward.3} parent=1 // pred_fallthru
      _
    // Predicated region
    $region26: #{rubber_toys_forward.3} parent=1 // pred_check
      _
    $region27: #{rubber_toys_forward.3} parent=1 // pred_check_branch
      %28 = sbr.rel (0) target = $region29
    $region28: #{rubber_toys_forward.3} parent=1 // pred_region
      _
    $region29: #{rubber_toys_forward.3} parent=1 // pred_fallthru
      _
    // Predicated region
    $region30: #{rubber_toys_forward.3} parent=1 // pred_check
      _
    $region31: #{rubber_toys_forward.3} parent=1 // pred_check_branch
      %30 = sbr.rel (0) target = $region33
    $region32: #{rubber_toys_forward.3} parent=1 // pred_region
      _
    $region33: #{rubber_toys_forward.3} parent=1 // pred_fallthru
      _
    // Predicated region
    $region34: #{rubber_toys_forward.3} parent=1 // pred_check
      _
    $region35: #{rubber_toys_forward.3} parent=1 // pred_check_branch
      %32 = sbr.rel (0) target = $region37
    $region36: #{rubber_toys_forward.3} parent=1 // pred_region
      _
    $region37: #{rubber_toys_forward.3} parent=1 // pred_fallthru
      _
    %v33 = vld [vmem:[%s0] sm:$0xff]
    %v34 = vld [vmem:[%s0 + $0x8] sm:$0xff]
    %v35 = vld [vmem:[%s0 + $0x10] sm:$0x3]
    %v36 = vld [vmem:[%s1] sm:$0xff]
    %v37 = vld [vmem:[%s1 + $0x8] sm:$0xff]
    %v38 = vld [vmem:[%s1 + $0x10] sm:$0xff]
    %v39 = vld [vmem:[%s1 + $0x18] sm:$0xff]
    %v40 = vld [vmem:[%s1 + $0x20] sm:$0xff]
    %v41 = vld [vmem:[%s1 + $0x28] sm:$0xff]
    %v42 = vld [vmem:[%s1 + $0x30] sm:$0xff]
    %v43 = vld [vmem:[%s1 + $0x38] sm:$0xff]
    %v44 = vld [vmem:[%s1 + $0x40] sm:$0xff]
    %v45 = vld [vmem:[%s1 + $0x48] sm:$0xff]
    %v46 = vld [vmem:[%s1 + $0x50] sm:$0xff]
    %v47 = vld [vmem:[%s1 + $0x58] sm:$0xff]
    %v48 = vld [vmem:[%s1 + $0x60] sm:$0xff]
    %v49 = vld [vmem:[%s1 + $0x68] sm:$0xff]
    %v50 = vld [vmem:[%s1 + $0x70] sm:$0xff]
    %v51 = vld [vmem:[%s1 + $0x78] sm:$0xff]
    %52 = vmatprep.subr.mxu0 0.0
    %53 = vmatpush1.msra.mxu0 %v36
    %54 = vmatprep.subr.mxu0 0.0
    %55 = vmatpush1.msra.mxu0 %v37
    %56 = vmatprep.subr.mxu0 0.0
    %57 = vmatpush1.msra.mxu0 %v38
    %58 = vmatprep.subr.mxu0 0.0
    %59 = vmatpush1.msra.mxu0 %v39
    %60 = vmatprep.subr.mxu0 0.0
    %61 = vmatpush1.msra.mxu0 %v40
    %62 = vmatprep.subr.mxu0 0.0
    %63 = vmatpush1.msra.mxu0 %v41
    %64 = vmatprep.subr.mxu0 0.0
    %65 = vmatpush1.msra.mxu0 %v42
    %66 = vmatprep.subr.mxu0 0.0
    %67 = vmatpush1.msra.mxu0 %v43
    %68 = vmatprep.subr.mxu0 0.0
    %69 = vmatpush1.msra.mxu0 %v44
    %70 = vmatprep.subr.mxu0 0.0
    %71 = vmatpush1.msra.mxu0 %v45
    %72 = vmatprep.subr.mxu0 0.0
    %73 = vmatpush1.msra.mxu0 %v46
    %74 = vmatprep.subr.mxu0 0.0
    %75 = vmatpush1.msra.mxu0 %v47
    %76 = vmatprep.subr.mxu0 0.0
    %77 = vmatpush1.msra.mxu0 %v48
    %78 = vmatprep.subr.mxu0 0.0
    %79 = vmatpush1.msra.mxu0 %v49
    %80 = vmatprep.subr.mxu0 0.0
    %81 = vmatpush1.msra.mxu0 %v50
    %82 = vmatprep.subr.mxu0 0.0
    %83 = vmatpush1.msra.mxu0 %v51
    %84 = vmatprep.subr.mxu0 0.0
    %85 = vmatpush1.msra.mxu0 0.0
    %86 = vmatprep.subr.mxu0 0.0
    %87 = vmatpush1.msra.mxu0 0.0
    %88 = vmatprep.subr.mxu0 0.0
    %89 = vmatpush1.msra.mxu0 0.0
    %90 = vmatprep.subr.mxu0 0.0
    %91 = vmatpush1.msra.mxu0 0.0
    %92 = vmatprep.subr.mxu0 0.0
    %93 = vmatpush1.msra.mxu0 0.0
    %94 = vmatprep.subr.mxu0 0.0
    %95 = vmatpush1.msra.mxu0 0.0
    %96 = vmatprep.subr.mxu0 0.0
    %97 = vmatpush1.msra.mxu0 0.0
    %98 = vmatprep.subr.mxu0 0.0
    %99 = vmatpush1.msra.mxu0 0.0
    %100 = vmatprep.subr.mxu0 0.0
    %101 = vmatpush1.msra.mxu0 0.0
    %102 = vmatprep.subr.mxu0 0.0
    %103 = vmatpush1.msra.mxu0 0.0
    %104 = vmatprep.subr.mxu0 0.0
    %105 = vmatpush1.msra.mxu0 0.0
    %106 = vmatprep.subr.mxu0 0.0
    %107 = vmatpush1.msra.mxu0 0.0
    %108 = vmatprep.subr.mxu0 0.0
    %109 = vmatpush1.msra.mxu0 0.0
    %110 = vmatprep.subr.mxu0 0.0
    %111 = vmatpush1.msra.mxu0 0.0
    %112 = vmatprep.subr.mxu0 0.0
    %113 = vmatpush1.msra.mxu0 0.0
    %114 = vmatprep.subr.mxu0 0.0
    %115 = vmatpush1.msra.mxu0 0.0
    %116 = vmatprep.mubr.f32.mxu0 0.0
    %117 = vmatmul.mubr.f32.gmra.mrb[0].mxu0 %v33
    %v118 = vpop.f32.mrb[0].mxu0
    %v119 = vadd.f32 0.0, %v118
    %v120 = vpop.f32.mrb[0].mxu0
    %121 = vmatprep.mubr.f32.mxu0 0.0
    %122 = vmatmul.mubr.f32.gmra.mrb[0].mxu0 %v34
    %v123 = vpop.f32.mrb[0].mxu0
    %v124 = vadd.f32 0.0, %v123
    %v125 = vpop.f32.mrb[0].mxu0
    %126 = vmatprep.mubr.f32.mxu0 0.0
    %127 = vmatmul.mubr.f32.gmra.mrb[0].mxu0 %v35
    %v128 = vpop.f32.mrb[0].mxu0
    %v129 = vadd.f32 0.0, %v128
    %v130 = vpop.f32.mrb[0].mxu0
    %131 = vdwg.mxu0
    %s132 = scalar_lea.vmem %s0, 24
    %v133 = vld [vmem:[%s132] sm:$0xff]
    %v134 = vld [vmem:[%s132 + $0x8] sm:$0xff]
    %v135 = vld [vmem:[%s132 + $0x10] sm:$0x3]
    %136 = vmatprep.subr.mxu0 0.0
    %137 = vmatpush1.msra.mxu0 %v36
    %138 = vmatprep.subr.mxu0 0.0
    %139 = vmatpush1.msra.mxu0 %v37
    %140 = vmatprep.subr.mxu0 0.0
    %141 = vmatpush1.msra.mxu0 %v38
    %142 = vmatprep.subr.mxu0 0.0
    %143 = vmatpush1.msra.mxu0 %v39
    %144 = vmatprep.subr.mxu0 0.0
    %145 = vmatpush1.msra.mxu0 %v40
    %146 = vmatprep.subr.mxu0 0.0
    %147 = vmatpush1.msra.mxu0 %v41
    %148 = vmatprep.subr.mxu0 0.0
    %149 = vmatpush1.msra.mxu0 %v42
    %150 = vmatprep.subr.mxu0 0.0
    %151 = vmatpush1.msra.mxu0 %v43
    %152 = vmatprep.subr.mxu0 0.0
    %153 = vmatpush1.msra.mxu0 %v44
    %154 = vmatprep.subr.mxu0 0.0
    %155 = vmatpush1.msra.mxu0 %v45
    %156 = vmatprep.subr.mxu0 0.0
    %157 = vmatpush1.msra.mxu0 %v46
    %158 = vmatprep.subr.mxu0 0.0
    %159 = vmatpush1.msra.mxu0 %v47
    %160 = vmatprep.subr.mxu0 0.0
    %161 = vmatpush1.msra.mxu0 %v48
    %162 = vmatprep.subr.mxu0 0.0
    %163 = vmatpush1.msra.mxu0 %v49
    %164 = vmatprep.subr.mxu0 0.0
    %165 = vmatpush1.msra.mxu0 %v50
    %166 = vmatprep.subr.mxu0 0.0
    %167 = vmatpush1.msra.mxu0 %v51
    %168 = vmatprep.subr.mxu0 0.0
    %169 = vmatpush1.msra.mxu0 0.0
    %170 = vmatprep.subr.mxu0 0.0
    %171 = vmatpush1.msra.mxu0 0.0
    %172 = vmatprep.subr.mxu0 0.0
    %173 = vmatpush1.msra.mxu0 0.0
    %174 = vmatprep.subr.mxu0 0.0
    %175 = vmatpush1.msra.mxu0 0.0
    %176 = vmatprep.subr.mxu0 0.0
    %177 = vmatpush1.msra.mxu0 0.0
    %178 = vmatprep.subr.mxu0 0.0
    %179 = vmatpush1.msra.mxu0 0.0
    %180 = vmatprep.subr.mxu0 0.0
    %181 = vmatpush1.msra.mxu0 0.0
    %182 = vmatprep.subr.mxu0 0.0
    %183 = vmatpush1.msra.mxu0 0.0
    %184 = vmatprep.subr.mxu0 0.0
    %185 = vmatpush1.msra.mxu0 0.0
    %186 = vmatprep.subr.mxu0 0.0
    %187 = vmatpush1.msra.mxu0 0.0
    %188 = vmatprep.subr.mxu0 0.0
    %189 = vmatpush1.msra.mxu0 0.0
    %190 = vmatprep.subr.mxu0 0.0
    %191 = vmatpush1.msra.mxu0 0.0
    %192 = vmatprep.subr.mxu0 0.0
    %193 = vmatpush1.msra.mxu0 0.0
    %194 = vmatprep.subr.mxu0 0.0
    %195 = vmatpush1.msra.mxu0 0.0
    %196 = vmatprep.subr.mxu0 0.0
    %197 = vmatpush1.msra.mxu0 0.0
    %198 = vmatprep.subr.mxu0 0.0
    %199 = vmatpush1.msra.mxu0 0.0
    %200 = vmatprep.mubr.f32.mxu0 0.0
    %201 = vmatmul.mubr.f32.gmra.mrb[0].mxu0 %v133
    %v202 = vpop.f32.mrb[0].mxu0
    %v203 = vadd.f32 0.0, %v202
    %v204 = vpop.f32.mrb[0].mxu0
    %205 = vmatprep.mubr.f32.mxu0 0.0
    %206 = vmatmul.mubr.f32.gmra.mrb[0].mxu0 %v134
    %v207 = vpop.f32.mrb[0].mxu0
    %v208 = vadd.f32 0.0, %v207
    %v209 = vpop.f32.mrb[0].mxu0
    %210 = vmatprep.mubr.f32.mxu0 0.0
    %211 = vmatmul.mubr.f32.gmra.mrb[0].mxu0 %v135
    %v212 = vpop.f32.mrb[0].mxu0
    %v213 = vadd.f32 0.0, %v212
    %v214 = vpop.f32.mrb[0].mxu0
    %215 = vdwg.mxu0
    %v216 = vmax.f32 %v119, %v203
    %v217 = vmax.f32 %v124, %v208
    %v218 = vmax.f32 %v129, %v213
    %s219 = scalar_lea.vmem %s0, 48
    %v220 = vld [vmem:[%s219] sm:$0xff]
    %v221 = vld [vmem:[%s219 + $0x8] sm:$0xff]
    %v222 = vld [vmem:[%s219 + $0x10] sm:$0x3]
    %223 = vmatprep.subr.mxu0 0.0
    %224 = vmatpush1.msra.mxu0 %v36
    %225 = vmatprep.subr.mxu0 0.0
    %226 = vmatpush1.msra.mxu0 %v37
    %227 = vmatprep.subr.mxu0 0.0
    %228 = vmatpush1.msra.mxu0 %v38
    %229 = vmatprep.subr.mxu0 0.0
    %230 = vmatpush1.msra.mxu0 %v39
    %231 = vmatprep.subr.mxu0 0.0
    %232 = vmatpush1.msra.mxu0 %v40
    %233 = vmatprep.subr.mxu0 0.0
    %234 = vmatpush1.msra.mxu0 %v41
    %235 = vmatprep.subr.mxu0 0.0
    %236 = vmatpush1.msra.mxu0 %v42
    %237 = vmatprep.subr.mxu0 0.0
    %238 = vmatpush1.msra.mxu0 %v43
    %239 = vmatprep.subr.mxu0 0.0
    %240 = vmatpush1.msra.mxu0 %v44
    %241 = vmatprep.subr.mxu0 0.0
    %242 = vmatpush1.msra.mxu0 %v45
    %243 = vmatprep.subr.mxu0 0.0
    %244 = vmatpush1.msra.mxu0 %v46
    %245 = vmatprep.subr.mxu0 0.0
    %246 = vmatpush1.msra.mxu0 %v47
    %247 = vmatprep.subr.mxu0 0.0
    %248 = vmatpush1.msra.mxu0 %v48
    %249 = vmatprep.subr.mxu0 0.0
    %250 = vmatpush1.msra.mxu0 %v49
    %251 = vmatprep.subr.mxu0 0.0
    %252 = vmatpush1.msra.mxu0 %v50
    %253 = vmatprep.subr.mxu0 0.0
    %254 = vmatpush1.msra.mxu0 %v51
    %255 = vmatprep.subr.mxu0 0.0
    %256 = vmatpush1.msra.mxu0 0.0
    %257 = vmatprep.subr.mxu0 0.0
    %258 = vmatpush1.msra.mxu0 0.0
    %259 = vmatprep.subr.mxu0 0.0
    %260 = vmatpush1.msra.mxu0 0.0
    %261 = vmatprep.subr.mxu0 0.0
    %262 = vmatpush1.msra.mxu0 0.0
    %263 = vmatprep.subr.mxu0 0.0
    %264 = vmatpush1.msra.mxu0 0.0
    %265 = vmatprep.subr.mxu0 0.0
    %266 = vmatpush1.msra.mxu0 0.0
    %267 = vmatprep.subr.mxu0 0.0
    %268 = vmatpush1.msra.mxu0 0.0
    %269 = vmatprep.subr.mxu0 0.0
    %270 = vmatpush1.msra.mxu0 0.0
    %271 = vmatprep.subr.mxu0 0.0
    %272 = vmatpush1.msra.mxu0 0.0
    %273 = vmatprep.subr.mxu0 0.0
    %274 = vmatpush1.msra.mxu0 0.0
    %275 = vmatprep.subr.mxu0 0.0
    %276 = vmatpush1.msra.mxu0 0.0
    %277 = vmatprep.subr.mxu0 0.0
    %278 = vmatpush1.msra.mxu0 0.0
    %279 = vmatprep.subr.mxu0 0.0
    %280 = vmatpush1.msra.mxu0 0.0
    %281 = vmatprep.subr.mxu0 0.0
    %282 = vmatpush1.msra.mxu0 0.0
    %283 = vmatprep.subr.mxu0 0.0
    %284 = vmatpush1.msra.mxu0 0.0
    %285 = vmatprep.subr.mxu0 0.0
    %286 = vmatpush1.msra.mxu0 0.0
    %287 = vmatprep.mubr.f32.mxu0 0.0
    %288 = vmatmul.mubr.f32.gmra.mrb[0].mxu0 %v220
    %v289 = vpop.f32.mrb[0].mxu0
    %v290 = vadd.f32 0.0, %v289
    %v291 = vpop.f32.mrb[0].mxu0
    %292 = vmatprep.mubr.f32.mxu0 0.0
    %293 = vmatmul.mubr.f32.gmra.mrb[0].mxu0 %v221
    %v294 = vpop.f32.mrb[0].mxu0
    %v295 = vadd.f32 0.0, %v294
    %v296 = vpop.f32.mrb[0].mxu0
    %297 = vmatprep.mubr.f32.mxu0 0.0
    %298 = vmatmul.mubr.f32.gmra.mrb[0].mxu0 %v222
    %v299 = vpop.f32.mrb[0].mxu0
    %v300 = vadd.f32 0.0, %v299
    %v301 = vpop.f32.mrb[0].mxu0
    %302 = vdwg.mxu0
    %v303 = vmax.f32 %v216, %v290
    %v304 = vmax.f32 %v217, %v295
    %v305 = vmax.f32 %v218, %v300
    %s306 = scalar_lea.vmem %s0, 72
    %v307 = vld [vmem:[%s306] sm:$0xff]
    %v308 = vld [vmem:[%s306 + $0x8] sm:$0xff]
    %v309 = vld [vmem:[%s306 + $0x10] sm:$0x3]
    %310 = vmatprep.subr.mxu0 0.0
    %311 = vmatpush1.msra.mxu0 %v36
    %312 = vmatprep.subr.mxu0 0.0
    %313 = vmatpush1.msra.mxu0 %v37
    %314 = vmatprep.subr.mxu0 0.0
    %315 = vmatpush1.msra.mxu0 %v38
    %316 = vmatprep.subr.mxu0 0.0
    %317 = vmatpush1.msra.mxu0 %v39
    %318 = vmatprep.subr.mxu0 0.0
    %319 = vmatpush1.msra.mxu0 %v40
    %320 = vmatprep.subr.mxu0 0.0
    %321 = vmatpush1.msra.mxu0 %v41
    %322 = vmatprep.subr.mxu0 0.0
    %323 = vmatpush1.msra.mxu0 %v42
    %324 = vmatprep.subr.mxu0 0.0
    %325 = vmatpush1.msra.mxu0 %v43
    %326 = vmatprep.subr.mxu0 0.0
    %327 = vmatpush1.msra.mxu0 %v44
    %328 = vmatprep.subr.mxu0 0.0
    %329 = vmatpush1.msra.mxu0 %v45
    %330 = vmatprep.subr.mxu0 0.0
    %331 = vmatpush1.msra.mxu0 %v46
    %332 = vmatprep.subr.mxu0 0.0
    %333 = vmatpush1.msra.mxu0 %v47
    %334 = vmatprep.subr.mxu0 0.0
    %335 = vmatpush1.msra.mxu0 %v48
    %336 = vmatprep.subr.mxu0 0.0
    %337 = vmatpush1.msra.mxu0 %v49
    %338 = vmatprep.subr.mxu0 0.0
    %339 = vmatpush1.msra.mxu0 %v50
    %340 = vmatprep.subr.mxu0 0.0
    %341 = vmatpush1.msra.mxu0 %v51
    %342 = vmatprep.subr.mxu0 0.0
    %343 = vmatpush1.msra.mxu0 0.0
    %344 = vmatprep.subr.mxu0 0.0
    %345 = vmatpush1.msra.mxu0 0.0
    %346 = vmatprep.subr.mxu0 0.0
    %347 = vmatpush1.msra.mxu0 0.0
    %348 = vmatprep.subr.mxu0 0.0
    %349 = vmatpush1.msra.mxu0 0.0
    %350 = vmatprep.subr.mxu0 0.0
    %351 = vmatpush1.msra.mxu0 0.0
    %352 = vmatprep.subr.mxu0 0.0
    %353 = vmatpush1.msra.mxu0 0.0
    %354 = vmatprep.subr.mxu0 0.0
    %355 = vmatpush1.msra.mxu0 0.0
    %356 = vmatprep.subr.mxu0 0.0
    %357 = vmatpush1.msra.mxu0 0.0
    %358 = vmatprep.subr.mxu0 0.0
    %359 = vmatpush1.msra.mxu0 0.0
    %360 = vmatprep.subr.mxu0 0.0
    %361 = vmatpush1.msra.mxu0 0.0
    %362 = vmatprep.subr.mxu0 0.0
    %363 = vmatpush1.msra.mxu0 0.0
    %364 = vmatprep.subr.mxu0 0.0
    %365 = vmatpush1.msra.mxu0 0.0
    %366 = vmatprep.subr.mxu0 0.0
    %367 = vmatpush1.msra.mxu0 0.0
    %368 = vmatprep.subr.mxu0 0.0
    %369 = vmatpush1.msra.mxu0 0.0
    %370 = vmatprep.subr.mxu0 0.0
    %371 = vmatpush1.msra.mxu0 0.0
    %372 = vmatprep.subr.mxu0 0.0
    %373 = vmatpush1.msra.mxu0 0.0
    %374 = vmatprep.mubr.f32.mxu0 0.0
    %375 = vmatmul.mubr.f32.gmra.mrb[0].mxu0 %v307
    %v376 = vpop.f32.mrb[0].mxu0
    %v377 = vadd.f32 0.0, %v376
    %v378 = vpop.f32.mrb[0].mxu0
    %379 = vmatprep.mubr.f32.mxu0 0.0
    %380 = vmatmul.mubr.f32.gmra.mrb[0].mxu0 %v308
    %v381 = vpop.f32.mrb[0].mxu0
    %v382 = vadd.f32 0.0, %v381
    %v383 = vpop.f32.mrb[0].mxu0
    %384 = vmatprep.mubr.f32.mxu0 0.0
    %385 = vmatmul.mubr.f32.gmra.mrb[0].mxu0 %v309
    %v386 = vpop.f32.mrb[0].mxu0
    %v387 = vadd.f32 0.0, %v386
    %v388 = vpop.f32.mrb[0].mxu0
    %389 = vdwg.mxu0
    %v390 = vmax.f32 %v303, %v377
    %v391 = vmax.f32 %v304, %v382
    %v392 = vmax.f32 %v305, %v387
    %v393 = vld [vmem:[%s2] sm:$0x1]
    %v395 = vlaneseq
    %v396 = vshrl.u32 %v395, 7
    %v397 = vsub.s32 0, %v396
    %v398 = vrot.slane %v393, %v397
    %v400 = vadd.f32 %v390, %v398
    %v401 = vadd.f32 %v391, %v398
    %v402 = vadd.f32 %v392, %v398
    %v403 = vmax.f32 %v400, 0.0
    %v404 = vmax.f32 %v401, 0.0
    %v405 = vmax.f32 %v402, 0.0
    %v407 = vrot.slane %v403, 2
    %v409 = vrot.slane %v403, 4
    %v411 = vrot.slane %v403, 6
    %v414 = vrot.slane %v404, 2
    %v416 = vrot.slane %v404, 4
    %v418 = vrot.slane %v404, 6
    %v420 = vld [vmem:[%s3] sm:$0xff]
    %v421 = vld [vmem:[%s3 + $0x8] sm:$0xff]
    %v422 = vld [vmem:[%s3 + $0x10] sm:$0xff]
    %v423 = vld [vmem:[%s3 + $0x18] sm:$0xff]
    %v424 = vld [vmem:[%s3 + $0x20] sm:$0xff]
    %v425 = vld [vmem:[%s3 + $0x28] sm:$0xff]
    %v426 = vld [vmem:[%s3 + $0x30] sm:$0xff]
    %v427 = vld [vmem:[%s3 + $0x38] sm:$0xff]
    %v428 = vld [vmem:[%s3 + $0x40] sm:$0xff]
    %v429 = vld [vmem:[%s3 + $0x48] sm:$0xff]
    %v430 = vld [vmem:[%s3 + $0x50] sm:$0xff]
    %v431 = vld [vmem:[%s3 + $0x58] sm:$0xff]
    %v432 = vld [vmem:[%s3 + $0x60] sm:$0xff]
    %v433 = vld [vmem:[%s3 + $0x68] sm:$0xff]
    %v434 = vld [vmem:[%s3 + $0x70] sm:$0xff]
    %v435 = vld [vmem:[%s3 + $0x78] sm:$0xff]
    %v436 = vld [vmem:[%s3 + $0x80] sm:$0xff]
    %v437 = vld [vmem:[%s3 + $0x88] sm:$0xff]
    %v438 = vld [vmem:[%s3 + $0x90] sm:$0xff]
    %v439 = vld [vmem:[%s3 + $0x98] sm:$0xff]
    %v440 = vld [vmem:[%s3 + $0xa0] sm:$0xff]
    %v441 = vld [vmem:[%s3 + $0xa8] sm:$0xff]
    %v442 = vld [vmem:[%s3 + $0xb0] sm:$0xff]
    %v443 = vld [vmem:[%s3 + $0xb8] sm:$0xff]
    %v444 = vld [vmem:[%s3 + $0xc0] sm:$0xff]
    %v445 = vld [vmem:[%s3 + $0xc8] sm:$0xff]
    %v446 = vld [vmem:[%s3 + $0xd0] sm:$0xff]
    %v447 = vld [vmem:[%s3 + $0xd8] sm:$0xff]
    %v448 = vld [vmem:[%s3 + $0xe0] sm:$0xff]
    %v449 = vld [vmem:[%s3 + $0xe8] sm:$0xff]
    %v450 = vld [vmem:[%s3 + $0xf0] sm:$0xff]
    %v451 = vld [vmem:[%s3 + $0xf8] sm:$0xff]
    %v452 = vld [vmem:[%s3 + $0x100] sm:$0xff]
    %v453 = vld [vmem:[%s3 + $0x108] sm:$0xff]
    %v454 = vld [vmem:[%s3 + $0x110] sm:$0xff]
    %v455 = vld [vmem:[%s3 + $0x118] sm:$0xff]
    %v456 = vld [vmem:[%s3 + $0x120] sm:$0xff]
    %v457 = vld [vmem:[%s3 + $0x128] sm:$0xff]
    %v458 = vld [vmem:[%s3 + $0x130] sm:$0xff]
    %v459 = vld [vmem:[%s3 + $0x138] sm:$0xff]
    %v460 = vld [vmem:[%s3 + $0x140] sm:$0xff]
    %v461 = vld [vmem:[%s3 + $0x148] sm:$0xff]
    %v462 = vld [vmem:[%s3 + $0x150] sm:$0xff]
    %v463 = vld [vmem:[%s3 + $0x158] sm:$0xff]
    %v464 = vld [vmem:[%s3 + $0x160] sm:$0xff]
    %v465 = vld [vmem:[%s3 + $0x168] sm:$0xff]
    %v466 = vld [vmem:[%s3 + $0x170] sm:$0xff]
    %v467 = vld [vmem:[%s3 + $0x178] sm:$0xff]
    %v468 = vld [vmem:[%s3 + $0x180] sm:$0xff]
    %v469 = vld [vmem:[%s3 + $0x188] sm:$0xff]
    %v470 = vld [vmem:[%s3 + $0x190] sm:$0xff]
    %v471 = vld [vmem:[%s3 + $0x198] sm:$0xff]
    %v472 = vld [vmem:[%s3 + $0x1a0] sm:$0xff]
    %v473 = vld [vmem:[%s3 + $0x1a8] sm:$0xff]
    %v474 = vld [vmem:[%s3 + $0x1b0] sm:$0xff]
    %v475 = vld [vmem:[%s3 + $0x1b8] sm:$0xff]
    %v476 = vld [vmem:[%s3 + $0x1c0] sm:$0xff]
    %v477 = vld [vmem:[%s3 + $0x1c8] sm:$0xff]
    %v478 = vld [vmem:[%s3 + $0x1d0] sm:$0xff]
    %v479 = vld [vmem:[%s3 + $0x1d8] sm:$0xff]
    %v480 = vld [vmem:[%s3 + $0x1e0] sm:$0xff]
    %v481 = vld [vmem:[%s3 + $0x1e8] sm:$0xff]
    %v482 = vld [vmem:[%s3 + $0x1f0] sm:$0xff]
    %v483 = vld [vmem:[%s3 + $0x1f8] sm:$0xff]
    %v484 = vld [vmem:[%s3 + $0x200] sm:$0xff]
    %v485 = vld [vmem:[%s3 + $0x208] sm:$0xff]
    %v486 = vld [vmem:[%s3 + $0x210] sm:$0xff]
    %v487 = vld [vmem:[%s3 + $0x218] sm:$0xff]
    %v488 = vld [vmem:[%s3 + $0x220] sm:$0xff]
    %v489 = vld [vmem:[%s3 + $0x228] sm:$0xff]
    %v490 = vld [vmem:[%s3 + $0x230] sm:$0xff]
    %v491 = vld [vmem:[%s3 + $0x238] sm:$0xff]
    %v492 = vld [vmem:[%s3 + $0x240] sm:$0xff]
    %v493 = vld [vmem:[%s3 + $0x248] sm:$0xff]
    %v494 = vld [vmem:[%s3 + $0x250] sm:$0xff]
    %v495 = vld [vmem:[%s3 + $0x258] sm:$0xff]
    %v496 = vld [vmem:[%s3 + $0x260] sm:$0xff]
    %v497 = vld [vmem:[%s3 + $0x268] sm:$0xff]
    %v498 = vld [vmem:[%s3 + $0x270] sm:$0xff]
    %v499 = vld [vmem:[%s3 + $0x278] sm:$0xff]
    %v500 = vld [vmem:[%s3 + $0x280] sm:$0xff]
    %v501 = vld [vmem:[%s3 + $0x288] sm:$0xff]
    %v502 = vld [vmem:[%s3 + $0x290] sm:$0xff]
    %v503 = vld [vmem:[%s3 + $0x298] sm:$0xff]
    %v504 = vld [vmem:[%s3 + $0x2a0] sm:$0xff]
    %v505 = vld [vmem:[%s3 + $0x2a8] sm:$0xff]
    %v506 = vld [vmem:[%s3 + $0x2b0] sm:$0xff]
    %v507 = vld [vmem:[%s3 + $0x2b8] sm:$0xff]
    %v508 = vld [vmem:[%s3 + $0x2c0] sm:$0xff]
    %v509 = vld [vmem:[%s3 + $0x2c8] sm:$0xff]
    %v510 = vld [vmem:[%s3 + $0x2d0] sm:$0xff]
    %v511 = vld [vmem:[%s3 + $0x2d8] sm:$0xff]
    %v512 = vld [vmem:[%s3 + $0x2e0] sm:$0xff]
    %v513 = vld [vmem:[%s3 + $0x2e8] sm:$0xff]
    %v514 = vld [vmem:[%s3 + $0x2f0] sm:$0xff]
    %v515 = vld [vmem:[%s3 + $0x2f8] sm:$0xff]
    %v516 = vld [vmem:[%s3 + $0x300] sm:$0xff]
    %v517 = vld [vmem:[%s3 + $0x308] sm:$0xff]
    %v518 = vld [vmem:[%s3 + $0x310] sm:$0xff]
    %v519 = vld [vmem:[%s3 + $0x318] sm:$0xff]
    %v520 = vld [vmem:[%s3 + $0x320] sm:$0xff]
    %v521 = vld [vmem:[%s3 + $0x328] sm:$0xff]
    %v522 = vld [vmem:[%s3 + $0x330] sm:$0xff]
    %v523 = vld [vmem:[%s3 + $0x338] sm:$0xff]
    %v524 = vld [vmem:[%s3 + $0x340] sm:$0xff]
    %v525 = vld [vmem:[%s3 + $0x348] sm:$0xff]
    %v526 = vld [vmem:[%s3 + $0x350] sm:$0xff]
    %v527 = vld [vmem:[%s3 + $0x358] sm:$0xff]
    %v528 = vld [vmem:[%s3 + $0x360] sm:$0xff]
    %v529 = vld [vmem:[%s3 + $0x368] sm:$0xff]
    %v530 = vld [vmem:[%s3 + $0x370] sm:$0xff]
    %v531 = vld [vmem:[%s3 + $0x378] sm:$0xff]
    %v532 = vld [vmem:[%s3 + $0x380] sm:$0xff]
    %v533 = vld [vmem:[%s3 + $0x388] sm:$0xff]
    %v534 = vld [vmem:[%s3 + $0x390] sm:$0xff]
    %v535 = vld [vmem:[%s3 + $0x398] sm:$0xff]
    %v536 = vld [vmem:[%s3 + $0x3a0] sm:$0xff]
    %v537 = vld [vmem:[%s3 + $0x3a8] sm:$0xff]
    %v538 = vld [vmem:[%s3 + $0x3b0] sm:$0xff]
    %v539 = vld [vmem:[%s3 + $0x3b8] sm:$0xff]
    %v540 = vld [vmem:[%s3 + $0x3c0] sm:$0xff]
    %v541 = vld [vmem:[%s3 + $0x3c8] sm:$0xff]
    %v542 = vld [vmem:[%s3 + $0x3d0] sm:$0xff]
    %v543 = vld [vmem:[%s3 + $0x3d8] sm:$0xff]
    %v544 = vld [vmem:[%s3 + $0x3e0] sm:$0xff]
    %v545 = vld [vmem:[%s3 + $0x3e8] sm:$0xff]
    %v546 = vld [vmem:[%s3 + $0x3f0] sm:$0xff]
    %v547 = vld [vmem:[%s3 + $0x3f8] sm:$0xff]
    %v548 = vld [vmem:[%s3 + $0x400] sm:$0xff]
    %v549 = vld [vmem:[%s3 + $0x408] sm:$0xff]
    %v550 = vld [vmem:[%s3 + $0x410] sm:$0xff]
    %v551 = vld [vmem:[%s3 + $0x418] sm:$0xff]
    %v552 = vld [vmem:[%s3 + $0x420] sm:$0xff]
    %v553 = vld [vmem:[%s3 + $0x428] sm:$0xff]
    %v554 = vld [vmem:[%s3 + $0x430] sm:$0xff]
    %v555 = vld [vmem:[%s3 + $0x438] sm:$0xff]
    %v556 = vld [vmem:[%s3 + $0x440] sm:$0xff]
    %v557 = vld [vmem:[%s3 + $0x448] sm:$0xff]
    %v558 = vld [vmem:[%s3 + $0x450] sm:$0xff]
    %v559 = vld [vmem:[%s3 + $0x458] sm:$0xff]
    %v560 = vld [vmem:[%s3 + $0x460] sm:$0xff]
    %v561 = vld [vmem:[%s3 + $0x468] sm:$0xff]
    %v562 = vld [vmem:[%s3 + $0x470] sm:$0xff]
    %v563 = vld [vmem:[%s3 + $0x478] sm:$0xff]
    %v564 = vld [vmem:[%s3 + $0x480] sm:$0xff]
    %v565 = vld [vmem:[%s3 + $0x488] sm:$0xff]
    %v566 = vld [vmem:[%s3 + $0x490] sm:$0xff]
    %v567 = vld [vmem:[%s3 + $0x498] sm:$0xff]
    %v568 = vld [vmem:[%s3 + $0x4a0] sm:$0xff]
    %v569 = vld [vmem:[%s3 + $0x4a8] sm:$0xff]
    %v570 = vld [vmem:[%s3 + $0x4b0] sm:$0xff]
    %v571 = vld [vmem:[%s3 + $0x4b8] sm:$0xff]
    %v572 = vld [vmem:[%s3 + $0x4c0] sm:$0xff]
    %v573 = vld [vmem:[%s3 + $0x4c8] sm:$0xff]
    %v574 = vld [vmem:[%s3 + $0x4d0] sm:$0xff]
    %v575 = vld [vmem:[%s3 + $0x4d8] sm:$0xff]
    %v576 = vld [vmem:[%s3 + $0x4e0] sm:$0xff]
    %v577 = vld [vmem:[%s3 + $0x4e8] sm:$0xff]
    %v578 = vld [vmem:[%s3 + $0x4f0] sm:$0xff]
    %v579 = vld [vmem:[%s3 + $0x4f8] sm:$0xff]
    %v580 = vld [vmem:[%s3 + $0x500] sm:$0xff]
    %v581 = vld [vmem:[%s3 + $0x508] sm:$0xff]
    %v582 = vld [vmem:[%s3 + $0x510] sm:$0xff]
    %v583 = vld [vmem:[%s3 + $0x518] sm:$0xff]
    %v584 = vld [vmem:[%s3 + $0x520] sm:$0xff]
    %v585 = vld [vmem:[%s3 + $0x528] sm:$0xff]
    %v586 = vld [vmem:[%s3 + $0x530] sm:$0xff]
    %v587 = vld [vmem:[%s3 + $0x538] sm:$0xff]
    %v588 = vld [vmem:[%s3 + $0x540] sm:$0xff]
    %v589 = vld [vmem:[%s3 + $0x548] sm:$0xff]
    %v590 = vld [vmem:[%s3 + $0x550] sm:$0xff]
    %v591 = vld [vmem:[%s3 + $0x558] sm:$0xff]
    %v592 = vld [vmem:[%s3 + $0x560] sm:$0xff]
    %v593 = vld [vmem:[%s3 + $0x568] sm:$0xff]
    %v594 = vld [vmem:[%s3 + $0x570] sm:$0xff]
    %v595 = vld [vmem:[%s3 + $0x578] sm:$0xff]
    %v596 = vld [vmem:[%s3 + $0x580] sm:$0xff]
    %v597 = vld [vmem:[%s3 + $0x588] sm:$0xff]
    %v598 = vld [vmem:[%s3 + $0x590] sm:$0xff]
    %v599 = vld [vmem:[%s3 + $0x598] sm:$0xff]
    %v600 = vld [vmem:[%s3 + $0x5a0] sm:$0xff]
    %v601 = vld [vmem:[%s3 + $0x5a8] sm:$0xff]
    %v602 = vld [vmem:[%s3 + $0x5b0] sm:$0xff]
    %v603 = vld [vmem:[%s3 + $0x5b8] sm:$0xff]
    %v604 = vld [vmem:[%s3 + $0x5c0] sm:$0xff]
    %v605 = vld [vmem:[%s3 + $0x5c8] sm:$0xff]
    %v606 = vld [vmem:[%s3 + $0x5d0] sm:$0xff]
    %v607 = vld [vmem:[%s3 + $0x5d8] sm:$0xff]
    %v608 = vld [vmem:[%s3 + $0x5e0] sm:$0xff]
    %v609 = vld [vmem:[%s3 + $0x5e8] sm:$0xff]
    %v610 = vld [vmem:[%s3 + $0x5f0] sm:$0xff]
    %v611 = vld [vmem:[%s3 + $0x5f8] sm:$0xff]
    %v612 = vld [vmem:[%s3 + $0x600] sm:$0xff]
    %v613 = vld [vmem:[%s3 + $0x608] sm:$0xff]
    %v614 = vld [vmem:[%s3 + $0x610] sm:$0xff]
    %v615 = vld [vmem:[%s3 + $0x618] sm:$0xff]
    %v616 = vld [vmem:[%s3 + $0x620] sm:$0xff]
    %v617 = vld [vmem:[%s3 + $0x628] sm:$0xff]
    %v618 = vld [vmem:[%s3 + $0x630] sm:$0xff]
    %v619 = vld [vmem:[%s3 + $0x638] sm:$0xff]
    %v620 = vld [vmem:[%s3 + $0x640] sm:$0xff]
    %v621 = vld [vmem:[%s3 + $0x648] sm:$0xff]
    %v622 = vld [vmem:[%s3 + $0x650] sm:$0xff]
    %v623 = vld [vmem:[%s3 + $0x658] sm:$0xff]
    %v624 = vld [vmem:[%s3 + $0x660] sm:$0xff]
    %v625 = vld [vmem:[%s3 + $0x668] sm:$0xff]
    %v626 = vld [vmem:[%s3 + $0x670] sm:$0xff]
    %v627 = vld [vmem:[%s3 + $0x678] sm:$0xff]
    %v628 = vld [vmem:[%s3 + $0x680] sm:$0xff]
    %v629 = vld [vmem:[%s3 + $0x688] sm:$0xff]
    %v630 = vld [vmem:[%s3 + $0x690] sm:$0xff]
    %v631 = vld [vmem:[%s3 + $0x698] sm:$0xff]
    %v632 = vld [vmem:[%s3 + $0x6a0] sm:$0xff]
    %v633 = vld [vmem:[%s3 + $0x6a8] sm:$0xff]
    %v634 = vld [vmem:[%s3 + $0x6b0] sm:$0xff]
    %v635 = vld [vmem:[%s3 + $0x6b8] sm:$0xff]
    %v636 = vld [vmem:[%s3 + $0x6c0] sm:$0xff]
    %v637 = vld [vmem:[%s3 + $0x6c8] sm:$0xff]
    %v638 = vld [vmem:[%s3 + $0x6d0] sm:$0xff]
    %v639 = vld [vmem:[%s3 + $0x6d8] sm:$0xff]
    %v640 = vld [vmem:[%s3 + $0x6e0] sm:$0xff]
    %v641 = vld [vmem:[%s3 + $0x6e8] sm:$0xff]
    %v642 = vld [vmem:[%s3 + $0x6f0] sm:$0xff]
    %v643 = vld [vmem:[%s3 + $0x6f8] sm:$0xff]
    %v644 = vld [vmem:[%s3 + $0x700] sm:$0xff]
    %v645 = vld [vmem:[%s3 + $0x708] sm:$0xff]
    %v646 = vld [vmem:[%s3 + $0x710] sm:$0xff]
    %v647 = vld [vmem:[%s3 + $0x718] sm:$0xff]
    %v648 = vld [vmem:[%s3 + $0x720] sm:$0xff]
    %v649 = vld [vmem:[%s3 + $0x728] sm:$0xff]
    %v650 = vld [vmem:[%s3 + $0x730] sm:$0xff]
    %v651 = vld [vmem:[%s3 + $0x738] sm:$0xff]
    %v652 = vld [vmem:[%s3 + $0x740] sm:$0xff]
    %v653 = vld [vmem:[%s3 + $0x748] sm:$0xff]
    %v654 = vld [vmem:[%s3 + $0x750] sm:$0xff]
    %v655 = vld [vmem:[%s3 + $0x758] sm:$0xff]
    %v656 = vld [vmem:[%s3 + $0x760] sm:$0xff]
    %v657 = vld [vmem:[%s3 + $0x768] sm:$0xff]
    %v658 = vld [vmem:[%s3 + $0x770] sm:$0xff]
    %v659 = vld [vmem:[%s3 + $0x778] sm:$0xff]
    %v660 = vld [vmem:[%s3 + $0x780] sm:$0xff]
    %v661 = vld [vmem:[%s3 + $0x788] sm:$0xff]
    %v662 = vld [vmem:[%s3 + $0x790] sm:$0xff]
    %v663 = vld [vmem:[%s3 + $0x798] sm:$0xff]
    %v664 = vld [vmem:[%s3 + $0x7a0] sm:$0xff]
    %v665 = vld [vmem:[%s3 + $0x7a8] sm:$0xff]
    %v666 = vld [vmem:[%s3 + $0x7b0] sm:$0xff]
    %v667 = vld [vmem:[%s3 + $0x7b8] sm:$0xff]
    %v668 = vld [vmem:[%s3 + $0x7c0] sm:$0xff]
    %v669 = vld [vmem:[%s3 + $0x7c8] sm:$0xff]
    %v670 = vld [vmem:[%s3 + $0x7d0] sm:$0xff]
    %v671 = vld [vmem:[%s3 + $0x7d8] sm:$0xff]
    %v672 = vld [vmem:[%s3 + $0x7e0] sm:$0xff]
    %v673 = vld [vmem:[%s3 + $0x7e8] sm:$0xff]
    %v674 = vld [vmem:[%s3 + $0x7f0] sm:$0xff]
    %v675 = vld [vmem:[%s3 + $0x7f8] sm:$0xff]
    %v676 = vld [vmem:[%s3 + $0x800] sm:$0xff]
    %v677 = vld [vmem:[%s3 + $0x808] sm:$0xff]
    %v678 = vld [vmem:[%s3 + $0x810] sm:$0xff]
    %v679 = vld [vmem:[%s3 + $0x818] sm:$0xff]
    %v680 = vld [vmem:[%s3 + $0x820] sm:$0xff]
    %v681 = vld [vmem:[%s3 + $0x828] sm:$0xff]
    %v682 = vld [vmem:[%s3 + $0x830] sm:$0xff]
    %v683 = vld [vmem:[%s3 + $0x838] sm:$0xff]
    %v684 = vld [vmem:[%s3 + $0x840] sm:$0xff]
    %v685 = vld [vmem:[%s3 + $0x848] sm:$0xff]
    %v686 = vld [vmem:[%s3 + $0x850] sm:$0xff]
    %v687 = vld [vmem:[%s3 + $0x858] sm:$0xff]
    %v688 = vld [vmem:[%s3 + $0x860] sm:$0xff]
    %v689 = vld [vmem:[%s3 + $0x868] sm:$0xff]
    %v690 = vld [vmem:[%s3 + $0x870] sm:$0xff]
    %v691 = vld [vmem:[%s3 + $0x878] sm:$0xff]
    %v692 = vld [vmem:[%s3 + $0x880] sm:$0xff]
    %v693 = vld [vmem:[%s3 + $0x888] sm:$0xff]
    %v694 = vld [vmem:[%s3 + $0x890] sm:$0xff]
    %v695 = vld [vmem:[%s3 + $0x898] sm:$0xff]
    %v696 = vld [vmem:[%s3 + $0x8a0] sm:$0xff]
    %v697 = vld [vmem:[%s3 + $0x8a8] sm:$0xff]
    %v698 = vld [vmem:[%s3 + $0x8b0] sm:$0xff]
    %v699 = vld [vmem:[%s3 + $0x8b8] sm:$0xff]
    %v700 = vld [vmem:[%s3 + $0x8c0] sm:$0xff]
    %v701 = vld [vmem:[%s3 + $0x8c8] sm:$0xff]
    %v702 = vld [vmem:[%s3 + $0x8d0] sm:$0xff]
    %v703 = vld [vmem:[%s3 + $0x8d8] sm:$0xff]
    %v704 = vld [vmem:[%s3 + $0x8e0] sm:$0xff]
    %v705 = vld [vmem:[%s3 + $0x8e8] sm:$0xff]
    %v706 = vld [vmem:[%s3 + $0x8f0] sm:$0xff]
    %v707 = vld [vmem:[%s3 + $0x8f8] sm:$0xff]
    %v708 = vld [vmem:[%s4] sm:$0x3]
    %v710 = vlaneseq
    %v711 = vshrl.u32 %v710, 7
    %v712 = vsub.s32 0, %v711
    %v713 = vrot.slane %v708, %v712
    %v714 = vlaneseq
    %v715 = vshrl.u32 %v714, 7
    %v716 = vsub.s32 1, %v715
    %v717 = vrot.slane %v708, %v716
    %720 = vmatprep.subr.mxu0 %v421
    %721 = vmatpush1.msra.mxu0 %v420
    %722 = vmatprep.subr.mxu0 %v423
    %723 = vmatpush1.msra.mxu0 %v422
    %724 = vmatprep.subr.mxu0 %v425
    %725 = vmatpush1.msra.mxu0 %v424
    %726 = vmatprep.subr.mxu0 %v427
    %727 = vmatpush1.msra.mxu0 %v426
    %728 = vmatprep.subr.mxu0 %v429
    %729 = vmatpush1.msra.mxu0 %v428
    %730 = vmatprep.subr.mxu0 %v431
    %731 = vmatpush1.msra.mxu0 %v430
    %732 = vmatprep.subr.mxu0 %v433
    %733 = vmatpush1.msra.mxu0 %v432
    %734 = vmatprep.subr.mxu0 %v435
    %735 = vmatpush1.msra.mxu0 %v434
    %736 = vmatprep.subr.mxu0 %v437
    %737 = vmatpush1.msra.mxu0 %v436
    %738 = vmatprep.subr.mxu0 %v439
    %739 = vmatpush1.msra.mxu0 %v438
    %740 = vmatprep.subr.mxu0 %v441
    %741 = vmatpush1.msra.mxu0 %v440
    %742 = vmatprep.subr.mxu0 %v443
    %743 = vmatpush1.msra.mxu0 %v442
    %744 = vmatprep.subr.mxu0 %v445
    %745 = vmatpush1.msra.mxu0 %v444
    %746 = vmatprep.subr.mxu0 %v447
    %747 = vmatpush1.msra.mxu0 %v446
    %748 = vmatprep.subr.mxu0 %v449
    %749 = vmatpush1.msra.mxu0 %v448
    %750 = vmatprep.subr.mxu0 %v451
    %751 = vmatpush1.msra.mxu0 %v450
    %752 = vmatprep.subr.mxu0 %v453
    %753 = vmatpush1.msra.mxu0 %v452
    %754 = vmatprep.subr.mxu0 %v455
    %755 = vmatpush1.msra.mxu0 %v454
    %756 = vmatprep.subr.mxu0 %v457
    %757 = vmatpush1.msra.mxu0 %v456
    %758 = vmatprep.subr.mxu0 %v459
    %759 = vmatpush1.msra.mxu0 %v458
    %760 = vmatprep.subr.mxu0 %v461
    %761 = vmatpush1.msra.mxu0 %v460
    %762 = vmatprep.subr.mxu0 %v463
    %763 = vmatpush1.msra.mxu0 %v462
    %764 = vmatprep.subr.mxu0 %v465
    %765 = vmatpush1.msra.mxu0 %v464
    %766 = vmatprep.subr.mxu0 %v467
    %767 = vmatpush1.msra.mxu0 %v466
    %768 = vmatprep.subr.mxu0 %v469
    %769 = vmatpush1.msra.mxu0 %v468
    %770 = vmatprep.subr.mxu0 %v471
    %771 = vmatpush1.msra.mxu0 %v470
    %772 = vmatprep.subr.mxu0 %v473
    %773 = vmatpush1.msra.mxu0 %v472
    %774 = vmatprep.subr.mxu0 %v475
    %775 = vmatpush1.msra.mxu0 %v474
    %776 = vmatprep.subr.mxu0 %v477
    %777 = vmatpush1.msra.mxu0 %v476
    %778 = vmatprep.subr.mxu0 %v479
    %779 = vmatpush1.msra.mxu0 %v478
    %780 = vmatprep.subr.mxu0 %v481
    %781 = vmatpush1.msra.mxu0 %v480
    %782 = vmatprep.subr.mxu0 %v483
    %783 = vmatpush1.msra.mxu0 %v482
    %784 = vmatprep.mubr.f32.mxu0 %v407
    %785 = vmatmul.mubr.f32.gmra.mrb[0].mxu0 %v403
    %v786 = vpop.f32.mrb[0].mxu0
    %v787 = vadd.f32 %v713, %v786
    %v788 = vpop.f32.mrb[0].mxu0
    %v789 = vadd.f32 %v717, %v788
    %790 = vdwg.mxu0
    %791 = vmatprep.subr.mxu0 %v485
    %792 = vmatpush1.msra.mxu0 %v484
    %793 = vmatprep.subr.mxu0 %v487
    %794 = vmatpush1.msra.mxu0 %v486
    %795 = vmatprep.subr.mxu0 %v489
    %796 = vmatpush1.msra.mxu0 %v488
    %797 = vmatprep.subr.mxu0 %v491
    %798 = vmatpush1.msra.mxu0 %v490
    %799 = vmatprep.subr.mxu0 %v493
    %800 = vmatpush1.msra.mxu0 %v492
    %801 = vmatprep.subr.mxu0 %v495
    %802 = vmatpush1.msra.mxu0 %v494
    %803 = vmatprep.subr.mxu0 %v497
    %804 = vmatpush1.msra.mxu0 %v496
    %805 = vmatprep.subr.mxu0 %v499
    %806 = vmatpush1.msra.mxu0 %v498
    %807 = vmatprep.subr.mxu0 %v501
    %808 = vmatpush1.msra.mxu0 %v500
    %809 = vmatprep.subr.mxu0 %v503
    %810 = vmatpush1.msra.mxu0 %v502
    %811 = vmatprep.subr.mxu0 %v505
    %812 = vmatpush1.msra.mxu0 %v504
    %813 = vmatprep.subr.mxu0 %v507
    %814 = vmatpush1.msra.mxu0 %v506
    %815 = vmatprep.subr.mxu0 %v509
    %816 = vmatpush1.msra.mxu0 %v508
    %817 = vmatprep.subr.mxu0 %v511
    %818 = vmatpush1.msra.mxu0 %v510
    %819 = vmatprep.subr.mxu0 %v513
    %820 = vmatpush1.msra.mxu0 %v512
    %821 = vmatprep.subr.mxu0 %v515
    %822 = vmatpush1.msra.mxu0 %v514
    %823 = vmatprep.subr.mxu0 %v517
    %824 = vmatpush1.msra.mxu0 %v516
    %825 = vmatprep.subr.mxu0 %v519
    %826 = vmatpush1.msra.mxu0 %v518
    %827 = vmatprep.subr.mxu0 %v521
    %828 = vmatpush1.msra.mxu0 %v520
    %829 = vmatprep.subr.mxu0 %v523
    %830 = vmatpush1.msra.mxu0 %v522
    %831 = vmatprep.subr.mxu0 %v525
    %832 = vmatpush1.msra.mxu0 %v524
    %833 = vmatprep.subr.mxu0 %v527
    %834 = vmatpush1.msra.mxu0 %v526
    %835 = vmatprep.subr.mxu0 %v529
    %836 = vmatpush1.msra.mxu0 %v528
    %837 = vmatprep.subr.mxu0 %v531
    %838 = vmatpush1.msra.mxu0 %v530
    %839 = vmatprep.subr.mxu0 %v533
    %840 = vmatpush1.msra.mxu0 %v532
    %841 = vmatprep.subr.mxu0 %v535
    %842 = vmatpush1.msra.mxu0 %v534
    %843 = vmatprep.subr.mxu0 %v537
    %844 = vmatpush1.msra.mxu0 %v536
    %845 = vmatprep.subr.mxu0 %v539
    %846 = vmatpush1.msra.mxu0 %v538
    %847 = vmatprep.subr.mxu0 %v541
    %848 = vmatpush1.msra.mxu0 %v540
    %849 = vmatprep.subr.mxu0 %v543
    %850 = vmatpush1.msra.mxu0 %v542
    %851 = vmatprep.subr.mxu0 %v545
    %852 = vmatpush1.msra.mxu0 %v544
    %853 = vmatprep.subr.mxu0 %v547
    %854 = vmatpush1.msra.mxu0 %v546
    %855 = vmatprep.mubr.f32.mxu0 %v411
    %856 = vmatmul.mubr.f32.gmra.mrb[0].mxu0 %v409
    %v857 = vpop.f32.mrb[0].mxu0
    %v858 = vadd.f32 %v787, %v857
    %v859 = vpop.f32.mrb[0].mxu0
    %v860 = vadd.f32 %v789, %v859
    %861 = vdwg.mxu0
    %862 = vmatprep.subr.mxu0 %v549
    %863 = vmatpush1.msra.mxu0 %v548
    %864 = vmatprep.subr.mxu0 %v551
    %865 = vmatpush1.msra.mxu0 %v550
    %866 = vmatprep.subr.mxu0 %v553
    %867 = vmatpush1.msra.mxu0 %v552
    %868 = vmatprep.subr.mxu0 %v555
    %869 = vmatpush1.msra.mxu0 %v554
    %870 = vmatprep.subr.mxu0 %v557
    %871 = vmatpush1.msra.mxu0 %v556
    %872 = vmatprep.subr.mxu0 %v559
    %873 = vmatpush1.msra.mxu0 %v558
    %874 = vmatprep.subr.mxu0 %v561
    %875 = vmatpush1.msra.mxu0 %v560
    %876 = vmatprep.subr.mxu0 %v563
    %877 = vmatpush1.msra.mxu0 %v562
    %878 = vmatprep.subr.mxu0 %v565
    %879 = vmatpush1.msra.mxu0 %v564
    %880 = vmatprep.subr.mxu0 %v567
    %881 = vmatpush1.msra.mxu0 %v566
    %882 = vmatprep.subr.mxu0 %v569
    %883 = vmatpush1.msra.mxu0 %v568
    %884 = vmatprep.subr.mxu0 %v571
    %885 = vmatpush1.msra.mxu0 %v570
    %886 = vmatprep.subr.mxu0 %v573
    %887 = vmatpush1.msra.mxu0 %v572
    %888 = vmatprep.subr.mxu0 %v575
    %889 = vmatpush1.msra.mxu0 %v574
    %890 = vmatprep.subr.mxu0 %v577
    %891 = vmatpush1.msra.mxu0 %v576
    %892 = vmatprep.subr.mxu0 %v579
    %893 = vmatpush1.msra.mxu0 %v578
    %894 = vmatprep.subr.mxu0 %v581
    %895 = vmatpush1.msra.mxu0 %v580
    %896 = vmatprep.subr.mxu0 %v583
    %897 = vmatpush1.msra.mxu0 %v582
    %898 = vmatprep.subr.mxu0 %v585
    %899 = vmatpush1.msra.mxu0 %v584
    %900 = vmatprep.subr.mxu0 %v587
    %901 = vmatpush1.msra.mxu0 %v586
    %902 = vmatprep.subr.mxu0 %v589
    %903 = vmatpush1.msra.mxu0 %v588
    %904 = vmatprep.subr.mxu0 %v591
    %905 = vmatpush1.msra.mxu0 %v590
    %906 = vmatprep.subr.mxu0 %v593
    %907 = vmatpush1.msra.mxu0 %v592
    %908 = vmatprep.subr.mxu0 %v595
    %909 = vmatpush1.msra.mxu0 %v594
    %910 = vmatprep.subr.mxu0 %v597
    %911 = vmatpush1.msra.mxu0 %v596
    %912 = vmatprep.subr.mxu0 %v599
    %913 = vmatpush1.msra.mxu0 %v598
    %914 = vmatprep.subr.mxu0 %v601
    %915 = vmatpush1.msra.mxu0 %v600
    %916 = vmatprep.subr.mxu0 %v603
    %917 = vmatpush1.msra.mxu0 %v602
    %918 = vmatprep.subr.mxu0 %v605
    %919 = vmatpush1.msra.mxu0 %v604
    %920 = vmatprep.subr.mxu0 %v607
    %921 = vmatpush1.msra.mxu0 %v606
    %922 = vmatprep.subr.mxu0 %v609
    %923 = vmatpush1.msra.mxu0 %v608
    %924 = vmatprep.subr.mxu0 %v611
    %925 = vmatpush1.msra.mxu0 %v610
    %926 = vmatprep.mubr.f32.mxu0 %v414
    %927 = vmatmul.mubr.f32.gmra.mrb[0].mxu0 %v404
    %v928 = vpop.f32.mrb[0].mxu0
    %v929 = vadd.f32 %v858, %v928
    %v930 = vpop.f32.mrb[0].mxu0
    %v931 = vadd.f32 %v860, %v930
    %932 = vdwg.mxu0
    %933 = vmatprep.subr.mxu0 %v613
    %934 = vmatpush1.msra.mxu0 %v612
    %935 = vmatprep.subr.mxu0 %v615
    %936 = vmatpush1.msra.mxu0 %v614
    %937 = vmatprep.subr.mxu0 %v617
    %938 = vmatpush1.msra.mxu0 %v616
    %939 = vmatprep.subr.mxu0 %v619
    %940 = vmatpush1.msra.mxu0 %v618
    %941 = vmatprep.subr.mxu0 %v621
    %942 = vmatpush1.msra.mxu0 %v620
    %943 = vmatprep.subr.mxu0 %v623
    %944 = vmatpush1.msra.mxu0 %v622
    %945 = vmatprep.subr.mxu0 %v625
    %946 = vmatpush1.msra.mxu0 %v624
    %947 = vmatprep.subr.mxu0 %v627
    %948 = vmatpush1.msra.mxu0 %v626
    %949 = vmatprep.subr.mxu0 %v629
    %950 = vmatpush1.msra.mxu0 %v628
    %951 = vmatprep.subr.mxu0 %v631
    %952 = vmatpush1.msra.mxu0 %v630
    %953 = vmatprep.subr.mxu0 %v633
    %954 = vmatpush1.msra.mxu0 %v632
    %955 = vmatprep.subr.mxu0 %v635
    %956 = vmatpush1.msra.mxu0 %v634
    %957 = vmatprep.subr.mxu0 %v637
    %958 = vmatpush1.msra.mxu0 %v636
    %959 = vmatprep.subr.mxu0 %v639
    %960 = vmatpush1.msra.mxu0 %v638
    %961 = vmatprep.subr.mxu0 %v641
    %962 = vmatpush1.msra.mxu0 %v640
    %963 = vmatprep.subr.mxu0 %v643
    %964 = vmatpush1.msra.mxu0 %v642
    %965 = vmatprep.subr.mxu0 %v645
    %966 = vmatpush1.msra.mxu0 %v644
    %967 = vmatprep.subr.mxu0 %v647
    %968 = vmatpush1.msra.mxu0 %v646
    %969 = vmatprep.subr.mxu0 %v649
    %970 = vmatpush1.msra.mxu0 %v648
    %971 = vmatprep.subr.mxu0 %v651
    %972 = vmatpush1.msra.mxu0 %v650
    %973 = vmatprep.subr.mxu0 %v653
    %974 = vmatpush1.msra.mxu0 %v652
    %975 = vmatprep.subr.mxu0 %v655
    %976 = vmatpush1.msra.mxu0 %v654
    %977 = vmatprep.subr.mxu0 %v657
    %978 = vmatpush1.msra.mxu0 %v656
    %979 = vmatprep.subr.mxu0 %v659
    %980 = vmatpush1.msra.mxu0 %v658
    %981 = vmatprep.subr.mxu0 %v661
    %982 = vmatpush1.msra.mxu0 %v660
    %983 = vmatprep.subr.mxu0 %v663
    %984 = vmatpush1.msra.mxu0 %v662
    %985 = vmatprep.subr.mxu0 %v665
    %986 = vmatpush1.msra.mxu0 %v664
    %987 = vmatprep.subr.mxu0 %v667
    %988 = vmatpush1.msra.mxu0 %v666
    %989 = vmatprep.subr.mxu0 %v669
    %990 = vmatpush1.msra.mxu0 %v668
    %991 = vmatprep.subr.mxu0 %v671
    %992 = vmatpush1.msra.mxu0 %v670
    %993 = vmatprep.subr.mxu0 %v673
    %994 = vmatpush1.msra.mxu0 %v672
    %995 = vmatprep.subr.mxu0 %v675
    %996 = vmatpush1.msra.mxu0 %v674
    %997 = vmatprep.mubr.f32.mxu0 %v418
    %998 = vmatmul.mubr.f32.gmra.mrb[0].mxu0 %v416
    %v999 = vpop.f32.mrb[0].mxu0
    %v1000 = vadd.f32 %v929, %v999
    %v1001 = vpop.f32.mrb[0].mxu0
    %v1002 = vadd.f32 %v931, %v1001
    %1003 = vdwg.mxu0
    %1004 = vmatprep.subr.mxu0 %v677
    %1005 = vmatpush1.msra.mxu0 %v676
    %1006 = vmatprep.subr.mxu0 %v679
    %1007 = vmatpush1.msra.mxu0 %v678
    %1008 = vmatprep.subr.mxu0 %v681
    %1009 = vmatpush1.msra.mxu0 %v680
    %1010 = vmatprep.subr.mxu0 %v683
    %1011 = vmatpush1.msra.mxu0 %v682
    %1012 = vmatprep.subr.mxu0 %v685
    %1013 = vmatpush1.msra.mxu0 %v684
    %1014 = vmatprep.subr.mxu0 %v687
    %1015 = vmatpush1.msra.mxu0 %v686
    %1016 = vmatprep.subr.mxu0 %v689
    %1017 = vmatpush1.msra.mxu0 %v688
    %1018 = vmatprep.subr.mxu0 %v691
    %1019 = vmatpush1.msra.mxu0 %v690
    %1020 = vmatprep.subr.mxu0 %v693
    %1021 = vmatpush1.msra.mxu0 %v692
    %1022 = vmatprep.subr.mxu0 %v695
    %1023 = vmatpush1.msra.mxu0 %v694
    %1024 = vmatprep.subr.mxu0 %v697
    %1025 = vmatpush1.msra.mxu0 %v696
    %1026 = vmatprep.subr.mxu0 %v699
    %1027 = vmatpush1.msra.mxu0 %v698
    %1028 = vmatprep.subr.mxu0 %v701
    %1029 = vmatpush1.msra.mxu0 %v700
    %1030 = vmatprep.subr.mxu0 %v703
    %1031 = vmatpush1.msra.mxu0 %v702
    %1032 = vmatprep.subr.mxu0 %v705
    %1033 = vmatpush1.msra.mxu0 %v704
    %1034 = vmatprep.subr.mxu0 %v707
    %1035 = vmatpush1.msra.mxu0 %v706
    %1036 = vmatprep.subr.mxu0 0.0
    %1037 = vmatpush1.msra.mxu0 0.0
    %1038 = vmatprep.subr.mxu0 0.0
    %1039 = vmatpush1.msra.mxu0 0.0
    %1040 = vmatprep.subr.mxu0 0.0
    %1041 = vmatpush1.msra.mxu0 0.0
    %1042 = vmatprep.subr.mxu0 0.0
    %1043 = vmatpush1.msra.mxu0 0.0
    %1044 = vmatprep.subr.mxu0 0.0
    %1045 = vmatpush1.msra.mxu0 0.0
    %1046 = vmatprep.subr.mxu0 0.0
    %1047 = vmatpush1.msra.mxu0 0.0
    %1048 = vmatprep.subr.mxu0 0.0
    %1049 = vmatpush1.msra.mxu0 0.0
    %1050 = vmatprep.subr.mxu0 0.0
    %1051 = vmatpush1.msra.mxu0 0.0
    %1052 = vmatprep.subr.mxu0 0.0
    %1053 = vmatpush1.msra.mxu0 0.0
    %1054 = vmatprep.subr.mxu0 0.0
    %1055 = vmatpush1.msra.mxu0 0.0
    %1056 = vmatprep.subr.mxu0 0.0
    %1057 = vmatpush1.msra.mxu0 0.0
    %1058 = vmatprep.subr.mxu0 0.0
    %1059 = vmatpush1.msra.mxu0 0.0
    %1060 = vmatprep.subr.mxu0 0.0
    %1061 = vmatpush1.msra.mxu0 0.0
    %1062 = vmatprep.subr.mxu0 0.0
    %1063 = vmatpush1.msra.mxu0 0.0
    %1064 = vmatprep.subr.mxu0 0.0
    %1065 = vmatpush1.msra.mxu0 0.0
    %1066 = vmatprep.subr.mxu0 0.0
    %1067 = vmatpush1.msra.mxu0 0.0
    %1068 = vmatprep.mubr.f32.mxu0 0.0
    %1069 = vmatmul.mubr.f32.gmra.mrb[0].mxu0 %v405
    %v1070 = vpop.f32.mrb[0].mxu0
    %v1071 = vadd.f32 %v1000, %v1070
    %v1072 = vpop.f32.mrb[0].mxu0
    %v1073 = vadd.f32 %v1002, %v1072
    %1074 = vdwg.mxu0
    %v1075 = vmax.f32 %v1071, 0.0
    %v1076 = vmax.f32 %v1073, 0.0
    %v1077 = vld [vmem:[%s5] sm:$0xff]
    %v1078 = vld [vmem:[%s5 + $0x8] sm:$0xff]
    %v1079 = vld [vmem:[%s5 + $0x10] sm:$0xff]
    %v1080 = vld [vmem:[%s5 + $0x18] sm:$0xff]
    %v1081 = vld [vmem:[%s5 + $0x20] sm:$0xff]
    %v1082 = vld [vmem:[%s5 + $0x28] sm:$0xff]
    %v1083 = vld [vmem:[%s5 + $0x30] sm:$0xff]
    %v1084 = vld [vmem:[%s5 + $0x38] sm:$0xff]
    %v1085 = vld [vmem:[%s5 + $0x40] sm:$0xff]
    %v1086 = vld [vmem:[%s5 + $0x48] sm:$0xff]
    %v1087 = vld [vmem:[%s5 + $0x50] sm:$0xff]
    %v1088 = vld [vmem:[%s5 + $0x58] sm:$0xff]
    %v1089 = vld [vmem:[%s5 + $0x60] sm:$0xff]
    %v1090 = vld [vmem:[%s5 + $0x68] sm:$0xff]
    %v1091 = vld [vmem:[%s5 + $0x70] sm:$0xff]
    %v1092 = vld [vmem:[%s5 + $0x78] sm:$0xff]
    %v1093 = vld [vmem:[%s5 + $0x80] sm:$0xff]
    %v1094 = vld [vmem:[%s5 + $0x88] sm:$0xff]
    %v1095 = vld [vmem:[%s5 + $0x90] sm:$0xff]
    %v1096 = vld [vmem:[%s5 + $0x98] sm:$0xff]
    %v1097 = vld [vmem:[%s5 + $0xa0] sm:$0xff]
    %v1098 = vld [vmem:[%s5 + $0xa8] sm:$0xff]
    %v1099 = vld [vmem:[%s5 + $0xb0] sm:$0xff]
    %v1100 = vld [vmem:[%s5 + $0xb8] sm:$0xff]
    %v1101 = vld [vmem:[%s5 + $0xc0] sm:$0xff]
    %v1102 = vld [vmem:[%s5 + $0xc8] sm:$0xff]
    %v1103 = vld [vmem:[%s5 + $0xd0] sm:$0xff]
    %v1104 = vld [vmem:[%s5 + $0xd8] sm:$0xff]
    %v1105 = vld [vmem:[%s5 + $0xe0] sm:$0xff]
    %v1106 = vld [vmem:[%s5 + $0xe8] sm:$0xff]
    %v1107 = vld [vmem:[%s5 + $0xf0] sm:$0xff]
    %v1108 = vld [vmem:[%s5 + $0xf8] sm:$0xff]
    %v1109 = vld [vmem:[%s6] sm:$0x1]
    %v1111 = vlaneseq
    %v1112 = vshrl.u32 %v1111, 7
    %v1113 = vsub.s32 0, %v1112
    %v1114 = vrot.slane %v1109, %v1113
    %1116 = vmatprep.subr.mxu0 0.0
    %1117 = vmatpush1.msra.mxu0 %v1077
    %1118 = vmatprep.subr.mxu0 0.0
    %1119 = vmatpush1.msra.mxu0 %v1078
    %1120 = vmatprep.subr.mxu0 0.0
    %1121 = vmatpush1.msra.mxu0 %v1079
    %1122 = vmatprep.subr.mxu0 0.0
    %1123 = vmatpush1.msra.mxu0 %v1080
    %1124 = vmatprep.subr.mxu0 0.0
    %1125 = vmatpush1.msra.mxu0 %v1081
    %1126 = vmatprep.subr.mxu0 0.0
    %1127 = vmatpush1.msra.mxu0 %v1082
    %1128 = vmatprep.subr.mxu0 0.0
    %1129 = vmatpush1.msra.mxu0 %v1083
    %1130 = vmatprep.subr.mxu0 0.0
    %1131 = vmatpush1.msra.mxu0 %v1084
    %1132 = vmatprep.subr.mxu0 0.0
    %1133 = vmatpush1.msra.mxu0 %v1085
    %1134 = vmatprep.subr.mxu0 0.0
    %1135 = vmatpush1.msra.mxu0 %v1086
    %1136 = vmatprep.subr.mxu0 0.0
    %1137 = vmatpush1.msra.mxu0 %v1087
    %1138 = vmatprep.subr.mxu0 0.0
    %1139 = vmatpush1.msra.mxu0 %v1088
    %1140 = vmatprep.subr.mxu0 0.0
    %1141 = vmatpush1.msra.mxu0 %v1089
    %1142 = vmatprep.subr.mxu0 0.0
    %1143 = vmatpush1.msra.mxu0 %v1090
    %1144 = vmatprep.subr.mxu0 0.0
    %1145 = vmatpush1.msra.mxu0 %v1091
    %1146 = vmatprep.subr.mxu0 0.0
    %1147 = vmatpush1.msra.mxu0 %v1092
    %1148 = vmatprep.subr.mxu0 0.0
    %1149 = vmatpush1.msra.mxu0 %v1093
    %1150 = vmatprep.subr.mxu0 0.0
    %1151 = vmatpush1.msra.mxu0 %v1094
    %1152 = vmatprep.subr.mxu0 0.0
    %1153 = vmatpush1.msra.mxu0 %v1095
    %1154 = vmatprep.subr.mxu0 0.0
    %1155 = vmatpush1.msra.mxu0 %v1096
    %1156 = vmatprep.subr.mxu0 0.0
    %1157 = vmatpush1.msra.mxu0 %v1097
    %1158 = vmatprep.subr.mxu0 0.0
    %1159 = vmatpush1.msra.mxu0 %v1098
    %1160 = vmatprep.subr.mxu0 0.0
    %1161 = vmatpush1.msra.mxu0 %v1099
    %1162 = vmatprep.subr.mxu0 0.0
    %1163 = vmatpush1.msra.mxu0 %v1100
    %1164 = vmatprep.subr.mxu0 0.0
    %1165 = vmatpush1.msra.mxu0 %v1101
    %1166 = vmatprep.subr.mxu0 0.0
    %1167 = vmatpush1.msra.mxu0 %v1102
    %1168 = vmatprep.subr.mxu0 0.0
    %1169 = vmatpush1.msra.mxu0 %v1103
    %1170 = vmatprep.subr.mxu0 0.0
    %1171 = vmatpush1.msra.mxu0 %v1104
    %1172 = vmatprep.subr.mxu0 0.0
    %1173 = vmatpush1.msra.mxu0 %v1105
    %1174 = vmatprep.subr.mxu0 0.0
    %1175 = vmatpush1.msra.mxu0 %v1106
    %1176 = vmatprep.subr.mxu0 0.0
    %1177 = vmatpush1.msra.mxu0 %v1107
    %1178 = vmatprep.subr.mxu0 0.0
    %1179 = vmatpush1.msra.mxu0 %v1108
    %1180 = vmatprep.mubr.f32.mxu0 %v1076
    %1181 = vmatmul.mubr.f32.gmra.mrb[0].mxu0 %v1075
    %v1182 = vpop.f32.mrb[0].mxu0
    %v1183 = vadd.f32 %v1114, %v1182
    %v1184 = vpop.f32.mrb[0].mxu0
    %1185 = vdwg.mxu0
    %v1186 = vmax.f32 %v1183, 0.0
    %v1187 = vld [vmem:[%s7] sm:$0xff]
    %v1188 = vld [vmem:[%s7 + $0x8] sm:$0xff]
    %v1189 = vld [vmem:[%s7 + $0x10] sm:$0xff]
    %v1190 = vld [vmem:[%s7 + $0x18] sm:$0xff]
    %v1191 = vld [vmem:[%s7 + $0x20] sm:$0xff]
    %v1192 = vld [vmem:[%s7 + $0x28] sm:$0xff]
    %v1193 = vld [vmem:[%s7 + $0x30] sm:$0xff]
    %v1194 = vld [vmem:[%s7 + $0x38] sm:$0xff]
    %v1195 = vld [vmem:[%s7 + $0x40] sm:$0xff]
    %v1196 = vld [vmem:[%s7 + $0x48] sm:$0xff]
    %v1197 = vld [vmem:[%s7 + $0x50] sm:$0xff]
    %v1198 = vld [vmem:[%s7 + $0x58] sm:$0xff]
    %v1199 = vld [vmem:[%s7 + $0x60] sm:$0xff]
    %v1200 = vld [vmem:[%s7 + $0x68] sm:$0xff]
    %v1201 = vld [vmem:[%s7 + $0x70] sm:$0xff]
    %v1202 = vld [vmem:[%s7 + $0x78] sm:$0xff]
    %v1203 = vld [vmem:[%s8] sm:$0x1]
    %v1205 = vlaneseq
    %v1206 = vshrl.u32 %v1205, 7
    %v1207 = vsub.s32 0, %v1206
    %v1208 = vrot.slane %v1203, %v1207
    %1210 = vmatprep.subr.mxu0 0.0
    %1211 = vmatpush1.msra.mxu0 %v1187
    %1212 = vmatprep.subr.mxu0 0.0
    %1213 = vmatpush1.msra.mxu0 %v1188
    %1214 = vmatprep.subr.mxu0 0.0
    %1215 = vmatpush1.msra.mxu0 %v1189
    %1216 = vmatprep.subr.mxu0 0.0
    %1217 = vmatpush1.msra.mxu0 %v1190
    %1218 = vmatprep.subr.mxu0 0.0
    %1219 = vmatpush1.msra.mxu0 %v1191
    %1220 = vmatprep.subr.mxu0 0.0
    %1221 = vmatpush1.msra.mxu0 %v1192
    %1222 = vmatprep.subr.mxu0 0.0
    %1223 = vmatpush1.msra.mxu0 %v1193
    %1224 = vmatprep.subr.mxu0 0.0
    %1225 = vmatpush1.msra.mxu0 %v1194
    %1226 = vmatprep.subr.mxu0 0.0
    %1227 = vmatpush1.msra.mxu0 %v1195
    %1228 = vmatprep.subr.mxu0 0.0
    %1229 = vmatpush1.msra.mxu0 %v1196
    %1230 = vmatprep.subr.mxu0 0.0
    %1231 = vmatpush1.msra.mxu0 %v1197
    %1232 = vmatprep.subr.mxu0 0.0
    %1233 = vmatpush1.msra.mxu0 %v1198
    %1234 = vmatprep.subr.mxu0 0.0
    %1235 = vmatpush1.msra.mxu0 %v1199
    %1236 = vmatprep.subr.mxu0 0.0
    %1237 = vmatpush1.msra.mxu0 %v1200
    %1238 = vmatprep.subr.mxu0 0.0
    %1239 = vmatpush1.msra.mxu0 %v1201
    %1240 = vmatprep.subr.mxu0 0.0
    %1241 = vmatpush1.msra.mxu0 %v1202
    %1242 = vmatprep.subr.mxu0 0.0
    %1243 = vmatpush1.msra.mxu0 0.0
    %1244 = vmatprep.subr.mxu0 0.0
    %1245 = vmatpush1.msra.mxu0 0.0
    %1246 = vmatprep.subr.mxu0 0.0
    %1247 = vmatpush1.msra.mxu0 0.0
    %1248 = vmatprep.subr.mxu0 0.0
    %1249 = vmatpush1.msra.mxu0 0.0
    %1250 = vmatprep.subr.mxu0 0.0
    %1251 = vmatpush1.msra.mxu0 0.0
    %1252 = vmatprep.subr.mxu0 0.0
    %1253 = vmatpush1.msra.mxu0 0.0
    %1254 = vmatprep.subr.mxu0 0.0
    %1255 = vmatpush1.msra.mxu0 0.0
    %1256 = vmatprep.subr.mxu0 0.0
    %1257 = vmatpush1.msra.mxu0 0.0
    %1258 = vmatprep.subr.mxu0 0.0
    %1259 = vmatpush1.msra.mxu0 0.0
    %1260 = vmatprep.subr.mxu0 0.0
    %1261 = vmatpush1.msra.mxu0 0.0
    %1262 = vmatprep.subr.mxu0 0.0
    %1263 = vmatpush1.msra.mxu0 0.0
    %1264 = vmatprep.subr.mxu0 0.0
    %1265 = vmatpush1.msra.mxu0 0.0
    %1266 = vmatprep.subr.mxu0 0.0
    %1267 = vmatpush1.msra.mxu0 0.0
    %1268 = vmatprep.subr.mxu0 0.0
    %1269 = vmatpush1.msra.mxu0 0.0
    %1270 = vmatprep.subr.mxu0 0.0
    %1271 = vmatpush1.msra.mxu0 0.0
    %1272 = vmatprep.subr.mxu0 0.0
    %1273 = vmatpush1.msra.mxu0 0.0
    %1274 = vmatprep.mubr.f32.mxu0 0.0
    %1275 = vmatmul.mubr.f32.gmra.mrb[0].mxu0 %v1186
    %v1276 = vpop.f32.mrb[0].mxu0
    %v1277 = vadd.f32 %v1208, %v1276
    %v1278 = vpop.f32.mrb[0].mxu0
    %1279 = vdwg.mxu0
    %1280 = vst [vmem:[#allocation2] sm:$0x3] %v1277
    // Predicated region
    $region38: #{rubber_toys_forward.3} parent=1 // pred_check
      _
    $region39: #{rubber_toys_forward.3} parent=1 // pred_check_branch
      %1282 = sbr.rel (0) target = $region41
    $region40: #{rubber_toys_forward.3} parent=1 // pred_region
      %s1284 = ssub.s32 32, 32
      %1285 = vsyncadd [#allocation3], %s1284
      %s1287 = sshll.u32 [#allocation2], 4
      %s1288 = int_to_ptr.vmem [resolvable:$true] %s1287
      %1290 = dma.vmem_to_hbm [thread:$0]  %s1288, 32, %s9, [#allocation3]
    $region41: #{rubber_toys_forward.3} parent=1 // pred_fallthru
      _
    // Predicated region
    $region42: #{rubber_toys_forward.3} parent=1 // pred_check
      _
    $region43: #{rubber_toys_forward.3} parent=1 // pred_check_branch
      %1292 = sbr.rel (0) target = $region45
    $region44: #{rubber_toys_forward.3} parent=1 // pred_region
      %1293 = dma.done [#allocation3], 32
    $region45: #{rubber_toys_forward.3} parent=1 // pred_fallthru
      _
    %1294 = vsyncpa [#allocation3], 1

</llo_original>
